<compile_context>
chip_gen: v6e
topology: v6e:2x2x1
jax: 0.10.0
libtpu: 0.0.40
codegen_flags: <defaults>
</compile_context>

<pallas_src>
import functools

import jax
import jax.numpy as jnp
from jax import lax
from jax.experimental import pallas as pl
from jax.experimental.pallas import tpu as pltpu

# ---------------- configuration ----------------
V_DIM = 32
L_DIM = 32
EMBED_DIM = 32
NUM_HEADS = 4
HEAD_DIM = EMBED_DIM // NUM_HEADS
SCALE = HEAD_DIM ** (-0.5)

STABLE_SOFTMAX_2D = False  # TODO(synk): True would need a global (all batch/head) max pre-pass.
CLAMP_MIN_FOR_UNDERFLOW = True
CLAMP_MAX_FOR_OVERFLOW = True


# ---------------- fused Pallas kernel ----------------
def _dot_nt(a, b):
    """(M, D) x (N, D) -> (M, N): contract the last dim of both operands
    (i.e. a @ b.T on the MXU, without an explicit in-kernel transpose)."""
    return lax.dot_general(a, b, (((1,), (1,)), ((), ())),
                           preferred_element_type=jnp.float32)


def _fused_bimha_kernel(v_ref, l_ref, wv_ref, bv_ref, wl_ref, bl_ref,
                        wov_ref, bov_ref, wol_ref, bol_ref,
                        mask_t_ref, mask_s_ref, *rest,
                        has_mask, clamp_min, clamp_max,
                        batch, tgt_len, src_len, num_heads, embed_dim):
    """Whole-batch BiMultiHeadAttention forward in one grid step.

    v_ref : (B*T, V_DIM)            l_ref : (B*S, L_DIM)
    wv_ref: (V_DIM, 2E) = [scale*W_q^T | W_vv^T]   bv_ref: (1, 2E)
    wl_ref: (L_DIM, 2E) = [W_k^T | W_vl^T]         bl_ref: (1, 2E)
    wov_ref: (E, V_DIM)  bov_ref: (1, V_DIM)
    wol_ref: (E, L_DIM)  bol_ref: (1, L_DIM)
    mask_t_ref: (H*T, E) head-block mask (1 where lane-head == row-block head)
    mask_s_ref: (H*S, E) head-block mask
    optional mb_ref: (B, S) additive language mask bias (0 or -9e15)
    outputs: ov_ref (B*T, V_DIM), ol_ref (B*S, L_DIM)
    """
    if has_mask:
        mb_ref, ov_ref, ol_ref = rest
    else:
        ov_ref, ol_ref = rest

    T, S, H, E = tgt_len, src_len, num_heads, embed_dim

    vb = v_ref[...].astype(jnp.float32)                    # (B*T, V_DIM)
    lb = l_ref[...].astype(jnp.float32)                    # (B*S, L_DIM)

    # Whole-batch fused projections: [scale*q | values_v] and [k | values_l].
    qvv = jnp.dot(vb, wv_ref[...], preferred_element_type=jnp.float32) + bv_ref[...]
    kvl = jnp.dot(lb, wl_ref[...], preferred_element_type=jnp.float32) + bl_ref[...]

    mask_t = mask_t_ref[...]                               # (H*T, E)
    mask_s = mask_s_ref[...]                               # (H*S, E)
    if has_mask:
        mbias = mb_ref[...]                                # (B, S)

    attn_v_parts = []
    attn_l_parts = []
    for b in range(batch):                                 # tiny static unroll over batch
        q_b = qvv[b * T:(b + 1) * T, :E]                   # (T, E)  (scale pre-folded)
        vv_b = qvv[b * T:(b + 1) * T, E:]                  # (T, E)
        k_b = kvl[b * S:(b + 1) * S, :E]                   # (S, E)
        vl_b = kvl[b * S:(b + 1) * S, E:]                  # (S, E)

        # Stacked-head (block-diagonal) operands: row block h only keeps the
        # head-h lanes, so ONE matmul produces all heads' scores at once.
        q_bd = jnp.concatenate([q_b] * H, axis=0) * mask_t     # (H*T, E)
        k_bd = jnp.concatenate([k_b] * H, axis=0) * mask_s     # (H*S, E)

        s_v = _dot_nt(q_bd, k_b)                           # (H*T, S): row h*T+t = head-h scores
        # TODO(synk): at GLIP scale derive s_l by transposing resident s_v tiles
        # (XLU) online instead of this second MXU matmul.
        s_l = _dot_nt(k_bd, q_b)                           # (H*S, T): per-head transpose of s_v

        if clamp_min:
            s_v = jnp.maximum(s_v, -50000.0)
            s_l = jnp.maximum(s_l, -50000.0)
        if clamp_max:
            s_v = jnp.minimum(s_v, 50000.0)
            s_l = jnp.minimum(s_l, 50000.0)

        # Language-side softmax (over the vision/tgt axis == plain row softmax).
        s_l = s_l - jnp.max(s_l, axis=-1, keepdims=True)
        if clamp_min:
            s_l = jnp.maximum(s_l, -50000.0)
        # (the reference's max-clamp here is a no-op after the subtraction -> dropped)
        e_l = jnp.exp(s_l)
        p_l = e_l * pl.reciprocal(jnp.sum(e_l, axis=-1, keepdims=True), approx=True)

        # Vision-side softmax (over the language/src axis), optional padding bias.
        if has_mask:
            s_v = s_v + mbias[b:b + 1, :]                  # one (1,S)->(H*T,S) broadcast / batch
        e_v = jnp.exp(s_v - jnp.max(s_v, axis=-1, keepdims=True))
        p_v = e_v * pl.reciprocal(jnp.sum(e_v, axis=-1, keepdims=True), approx=True)

        # TODO(synk): dropout on p_v / p_l skipped (eval-mode semantics).

        # Prob @ V for all heads in one matmul each; then fold the stacked-head
        # rows back onto (rows, E) with the same block masks (heads end up
        # packed on the lane axis == torch transpose(1,2).reshape layout).
        o_v = jnp.dot(p_v, vl_b, preferred_element_type=jnp.float32) * mask_t  # (H*T, E)
        o_l = jnp.dot(p_l, vv_b, preferred_element_type=jnp.float32) * mask_s  # (H*S, E)

        attn_v_b = o_v[0:T]
        attn_l_b = o_l[0:S]
        for h in range(1, H):
            attn_v_b = attn_v_b + o_v[h * T:(h + 1) * T]
            attn_l_b = attn_l_b + o_l[h * S:(h + 1) * S]
        attn_v_parts.append(attn_v_b)                      # (T, E)
        attn_l_parts.append(attn_l_b)                      # (S, E)

    attn_v = jnp.concatenate(attn_v_parts, axis=0)         # (B*T, E)
    attn_l = jnp.concatenate(attn_l_parts, axis=0)         # (B*S, E)

    # Whole-batch output projections.
    out_v = jnp.dot(attn_v, wov_ref[...], preferred_element_type=jnp.float32) + bov_ref[...]
    out_l = jnp.dot(attn_l, wol_ref[...], preferred_element_type=jnp.float32) + bol_ref[...]
    ov_ref[...] = out_v.astype(ov_ref.dtype)
    ol_ref[...] = out_l.astype(ol_ref.dtype)


def _head_block_mask(seq_len, num_heads, head_dim):
    """(num_heads*seq_len, num_heads*head_dim) f32: 1 where the lane's head
    equals the row block's head, else 0 (trace-time constant)."""
    row_head = jnp.arange(num_heads * seq_len, dtype=jnp.int32) // seq_len
    col_head = jnp.arange(num_heads * head_dim, dtype=jnp.int32) // head_dim
    return (row_head[:, None] == col_head[None, :]).astype(jnp.float32)


def bi_multihead_attention(params, v, l, attention_mask_l=None):
    """v: (B, T, V_DIM), l: (B, S, L_DIM), attention_mask_l: None or (B, S)."""
    bsz, tgt_len, _ = v.shape
    src_len = l.shape[1]
    has_mask = attention_mask_l is not None

    # Trace-time weight prep: pre-transpose Linear weights to (in, out), fuse
    # the two same-input projections, and fold `scale` into the q half.
    w_v_cat = jnp.concatenate(
        [params["v_proj"]["w"].T * SCALE, params["values_v_proj"]["w"].T], axis=1)  # (V_DIM, 2E)
    b_v_cat = jnp.concatenate(
        [params["v_proj"]["b"] * SCALE, params["values_v_proj"]["b"]])[None, :]     # (1, 2E)
    w_l_cat = jnp.concatenate(
        [params["l_proj"]["w"].T, params["values_l_proj"]["w"].T], axis=1)          # (L_DIM, 2E)
    b_l_cat = jnp.concatenate(
        [params["l_proj"]["b"], params["values_l_proj"]["b"]])[None, :]             # (1, 2E)
    w_ov = params["out_v_proj"]["w"].T                                              # (E, V_DIM)
    b_ov = params["out_v_proj"]["b"][None, :]                                       # (1, V_DIM)
    w_ol = params["out_l_proj"]["w"].T                                              # (E, L_DIM)
    b_ol = params["out_l_proj"]["b"][None, :]                                       # (1, L_DIM)

    mask_t = _head_block_mask(tgt_len, NUM_HEADS, HEAD_DIM)                         # (H*T, E)
    mask_s = _head_block_mask(src_len, NUM_HEADS, HEAD_DIM)                         # (H*S, E)

    # Fold batch into the row (sublane) axis — no per-batch grid steps.
    v2 = v.reshape(bsz * tgt_len, V_DIM)
    l2 = l.reshape(bsz * src_len, L_DIM)

    kernel = functools.partial(
        _fused_bimha_kernel,
        has_mask=has_mask,
        clamp_min=CLAMP_MIN_FOR_UNDERFLOW,
        clamp_max=CLAMP_MAX_FOR_OVERFLOW,
        batch=bsz, tgt_len=tgt_len, src_len=src_len,
        num_heads=NUM_HEADS, embed_dim=EMBED_DIM)

    def _full(arr):  # whole-array block, same block for the (single) grid step
        return pl.BlockSpec(arr.shape, lambda i: (0,) * arr.ndim)

    args = [v2, l2, w_v_cat, b_v_cat, w_l_cat, b_l_cat,
            w_ov, b_ov, w_ol, b_ol, mask_t, mask_s]
    in_specs = [_full(a) for a in args]
    if has_mask:
        mask_bias = jnp.where(attention_mask_l == 0, -9e15, 0.0).astype(jnp.float32)  # (B, S)
        in_specs.append(_full(mask_bias))
        args.append(mask_bias)

    out_v, out_l = pl.pallas_call(
        kernel,
        out_shape=(jax.ShapeDtypeStruct((bsz * tgt_len, V_DIM), jnp.float32),
                   jax.ShapeDtypeStruct((bsz * src_len, L_DIM), jnp.float32)),
        grid_spec=pltpu.PrefetchScalarGridSpec(
            num_scalar_prefetch=0,
            grid=(1,),                       # single step: launch + pipeline overhead paid once
            in_specs=in_specs,
            out_specs=[
                pl.BlockSpec((bsz * tgt_len, V_DIM), lambda i: (0, 0)),
                pl.BlockSpec((bsz * src_len, L_DIM), lambda i: (0, 0)),
            ],
        ),
        # VMEM footprint is a few tens of KiB at these shapes -> default limit is fine.
        compiler_params=pltpu.CompilerParams(
            dimension_semantics=("arbitrary",)),
    )(*args)
    return (out_v.reshape(bsz, tgt_len, V_DIM),
            out_l.reshape(bsz, src_len, L_DIM))


# ---------------- parameter init (xavier_uniform + zero bias, torch Linear layout) ----------------
def xavier_uniform(key, out_dim, in_dim):
    a = (6.0 / (in_dim + out_dim)) ** 0.5
    return jax.random.uniform(key, (out_dim, in_dim), jnp.float32, -a, a)


def init_params(key):
    ks = jax.random.split(key, 6)
    names = ["v_proj", "l_proj", "values_v_proj", "values_l_proj",
             "out_v_proj", "out_l_proj"]
    dims = [(EMBED_DIM, V_DIM), (EMBED_DIM, L_DIM), (EMBED_DIM, V_DIM),
            (EMBED_DIM, L_DIM), (V_DIM, EMBED_DIM), (L_DIM, EMBED_DIM)]
    params = {}
    for name, (o, i), k in zip(names, dims, ks):
        params[name] = {"w": xavier_uniform(k, o, i),
                        "b": jnp.zeros((o,), jnp.float32)}
    return params


# ---------------- pure-JAX reference (sanity check) ----------------
def reference(params, v, l, attention_mask_l=None):
    bsz, tgt_len, _ = v.shape
    src_len = l.shape[1]

    def lin(x, p):
        return x @ p["w"].T + p["b"]

    def shape_heads(x, seq):
        return x.reshape(bsz, seq, NUM_HEADS, HEAD_DIM).transpose(0, 2, 1, 3)

    q = lin(v, params["v_proj"]) * SCALE
    k = lin(l, params["l_proj"])
    vv = lin(v, params["values_v_proj"])
    vl = lin(l, params["values_l_proj"])

    q4 = shape_heads(q, tgt_len)
    k4 = shape_heads(k, src_len)
    vv4 = shape_heads(vv, tgt_len)
    vl4 = shape_heads(vl, src_len)

    s = jnp.einsum("bhtd,bhsd->bhts", q4, k4)
    if CLAMP_MIN_FOR_UNDERFLOW:
        s = jnp.maximum(s, -50000.0)
    if CLAMP_MAX_FOR_OVERFLOW:
        s = jnp.minimum(s, 50000.0)
    sT = jnp.swapaxes(s, -1, -2)
    sT = sT - jnp.max(sT, axis=-1, keepdims=True)
    if CLAMP_MIN_FOR_UNDERFLOW:
        sT = jnp.maximum(sT, -50000.0)
    if CLAMP_MAX_FOR_OVERFLOW:
        sT = jnp.minimum(sT, 50000.0)
    p_l = jax.nn.softmax(sT, axis=-1)
    if attention_mask_l is not None:
        bias = jnp.where(attention_mask_l == 0, -9e15, 0.0)[:, None, None, :]
        s = s + bias
    p_v = jax.nn.softmax(s, axis=-1)

    ov = jnp.einsum("bhts,bhsd->bhtd", p_v, vl4)
    ol = jnp.einsum("bhst,bhtd->bhsd", p_l, vv4)
    ov = ov.transpose(0, 2, 1, 3).reshape(bsz, tgt_len, EMBED_DIM)
    ol = ol.transpose(0, 2, 1, 3).reshape(bsz, src_len, EMBED_DIM)
    return lin(ov, params["out_v_proj"]), lin(ol, params["out_l_proj"])


# ---------------- main ----------------
if __name__ == "__main__":
    key = jax.random.PRNGKey(0)
    kp, kv, kl = jax.random.split(key, 3)

    bsz, tgt_len, src_len = 2, 16, 8
    params = init_params(kp)
    v = jax.random.normal(kv, (bsz, tgt_len, V_DIM), jnp.float32)
    l = jax.random.normal(kl, (bsz, src_len, L_DIM), jnp.float32)

    # no-mask path
    out_v, out_l = jax.block_until_ready(
        bi_multihead_attention(params, v, l, attention_mask_l=None))
    ref_v, ref_l = reference(params, v, l, attention_mask_l=None)
    assert jnp.allclose(out_v, ref_v, atol=3e-3, rtol=3e-3), "vision output mismatch"
    assert jnp.allclose(out_l, ref_l, atol=3e-3, rtol=3e-3), "language output mismatch"

    # masked path (some padded language tokens)
    attn_mask_l = jnp.ones((bsz, src_len), jnp.int32)
    attn_mask_l = attn_mask_l.at[0, -2:].set(0).at[1, -3:].set(0)
    out_v_m, out_l_m = jax.block_until_ready(
        bi_multihead_attention(params, v, l, attention_mask_l=attn_mask_l))
    ref_v_m, ref_l_m = reference(params, v, l, attention_mask_l=attn_mask_l)
    assert jnp.allclose(out_v_m, ref_v_m, atol=3e-3, rtol=3e-3), "masked vision output mismatch"
    assert jnp.allclose(out_l_m, ref_l_m, atol=3e-3, rtol=3e-3), "masked language output mismatch"

    print("KERNEL_OK")
</pallas_src>

<mosaic_0001>
module attributes {stable_mosaic.version = 11 : i64} {
  func.func @_fused_bimha_kernel(%arg0: i32, %arg1: memref<32x32xf32, #tpu.memory_space<vmem>>, %arg2: memref<16x32xf32, #tpu.memory_space<vmem>>, %arg3: memref<32x64xf32, #tpu.memory_space<vmem>>, %arg4: memref<1x64xf32, #tpu.memory_space<vmem>>, %arg5: memref<32x64xf32, #tpu.memory_space<vmem>>, %arg6: memref<1x64xf32, #tpu.memory_space<vmem>>, %arg7: memref<32x32xf32, #tpu.memory_space<vmem>>, %arg8: memref<1x32xf32, #tpu.memory_space<vmem>>, %arg9: memref<32x32xf32, #tpu.memory_space<vmem>>, %arg10: memref<1x32xf32, #tpu.memory_space<vmem>>, %arg11: memref<64x32xf32, #tpu.memory_space<vmem>>, %arg12: memref<32x32xf32, #tpu.memory_space<vmem>>, %arg13: memref<32x32xf32, #tpu.memory_space<vmem>>, %arg14: memref<16x32xf32, #tpu.memory_space<vmem>>) attributes {dimension_semantics = [#tpu.dimension_semantics<arbitrary>], iteration_bounds = array<i64: 1>, scalar_prefetch = 0 : i64, scratch_operands = 0 : i64, tpu.core_type = #tpu.core_type<tc>, window_params = [{pipeline_mode = #tpu.pipeline_mode<synchronous>, transform_indices = @transform_0, window_bounds = array<i64: 32, 32>}, {pipeline_mode = #tpu.pipeline_mode<synchronous>, transform_indices = @transform_1, window_bounds = array<i64: 16, 32>}, {pipeline_mode = #tpu.pipeline_mode<synchronous>, transform_indices = @transform_2, window_bounds = array<i64: 32, 64>}, {pipeline_mode = #tpu.pipeline_mode<synchronous>, transform_indices = @transform_3, window_bounds = array<i64: 1, 64>}, {pipeline_mode = #tpu.pipeline_mode<synchronous>, transform_indices = @transform_4, window_bounds = array<i64: 32, 64>}, {pipeline_mode = #tpu.pipeline_mode<synchronous>, transform_indices = @transform_5, window_bounds = array<i64: 1, 64>}, {pipeline_mode = #tpu.pipeline_mode<synchronous>, transform_indices = @transform_6, window_bounds = array<i64: 32, 32>}, {pipeline_mode = #tpu.pipeline_mode<synchronous>, transform_indices = @transform_7, window_bounds = array<i64: 1, 32>}, {pipeline_mode = #tpu.pipeline_mode<synchronous>, transform_indices = @transform_8, window_bounds = array<i64: 32, 32>}, {pipeline_mode = #tpu.pipeline_mode<synchronous>, transform_indices = @transform_9, window_bounds = array<i64: 1, 32>}, {pipeline_mode = #tpu.pipeline_mode<synchronous>, transform_indices = @transform_10, window_bounds = array<i64: 64, 32>}, {pipeline_mode = #tpu.pipeline_mode<synchronous>, transform_indices = @transform_11, window_bounds = array<i64: 32, 32>}, {pipeline_mode = #tpu.pipeline_mode<synchronous>, transform_indices = @transform_12, window_bounds = array<i64: 32, 32>}, {pipeline_mode = #tpu.pipeline_mode<synchronous>, transform_indices = @transform_13, window_bounds = array<i64: 16, 32>}]} {
    %c0 = arith.constant 0 : index
    %c0_0 = arith.constant 0 : index
    %0 = vector.load %arg1[%c0, %c0_0] : memref<32x32xf32, #tpu.memory_space<vmem>>, vector<32x32xf32>
    %c0_1 = arith.constant 0 : index
    %c0_2 = arith.constant 0 : index
    %1 = vector.load %arg2[%c0_1, %c0_2] : memref<16x32xf32, #tpu.memory_space<vmem>>, vector<16x32xf32>
    %c0_3 = arith.constant 0 : index
    %c0_4 = arith.constant 0 : index
    %2 = vector.load %arg3[%c0_3, %c0_4] : memref<32x64xf32, #tpu.memory_space<vmem>>, vector<32x64xf32>
    %cst = arith.constant dense<0.000000e+00> : vector<32x64xf32>
    %3 = tpu.matmul %0, %2, %cst {dimension_numbers = #tpu.dot_dimension_numbers<[1], [0], [0], [1], [0, 0, 1, 1], [], []>} : vector<32x32xf32>, vector<32x64xf32>, vector<32x64xf32> -> vector<32x64xf32>
    %c0_5 = arith.constant 0 : index
    %c0_6 = arith.constant 0 : index
    %4 = vector.load %arg4[%c0_5, %c0_6] : memref<1x64xf32, #tpu.memory_space<vmem>>, vector<1x64xf32>
    %5 = vector.broadcast %4 : vector<1x64xf32> to vector<32x64xf32>
    %6 = arith.addf %3, %5 : vector<32x64xf32>
    %c0_7 = arith.constant 0 : index
    %c0_8 = arith.constant 0 : index
    %7 = vector.load %arg5[%c0_7, %c0_8] : memref<32x64xf32, #tpu.memory_space<vmem>>, vector<32x64xf32>
    %cst_9 = arith.constant dense<0.000000e+00> : vector<16x64xf32>
    %8 = tpu.matmul %1, %7, %cst_9 {dimension_numbers = #tpu.dot_dimension_numbers<[1], [0], [0], [1], [0, 0, 1, 1], [], []>} : vector<16x32xf32>, vector<32x64xf32>, vector<16x64xf32> -> vector<16x64xf32>
    %c0_10 = arith.constant 0 : index
    %c0_11 = arith.constant 0 : index
    %9 = vector.load %arg6[%c0_10, %c0_11] : memref<1x64xf32, #tpu.memory_space<vmem>>, vector<1x64xf32>
    %10 = vector.broadcast %9 : vector<1x64xf32> to vector<16x64xf32>
    %11 = arith.addf %8, %10 : vector<16x64xf32>
    %c0_12 = arith.constant 0 : index
    %c0_13 = arith.constant 0 : index
    %12 = vector.load %arg11[%c0_12, %c0_13] : memref<64x32xf32, #tpu.memory_space<vmem>>, vector<64x32xf32>
    %c0_14 = arith.constant 0 : index
    %c0_15 = arith.constant 0 : index
    %13 = vector.load %arg12[%c0_14, %c0_15] : memref<32x32xf32, #tpu.memory_space<vmem>>, vector<32x32xf32>
    %14 = vector.extract_strided_slice %6 {offsets = [0, 0], sizes = [16, 32], strides = [1, 1]} : vector<32x64xf32> to vector<16x32xf32>
    %15 = vector.extract_strided_slice %6 {offsets = [0, 32], sizes = [16, 32], strides = [1, 1]} : vector<32x64xf32> to vector<16x32xf32>
    %16 = vector.extract_strided_slice %11 {offsets = [0, 0], sizes = [8, 32], strides = [1, 1]} : vector<16x64xf32> to vector<8x32xf32>
    %17 = vector.extract_strided_slice %11 {offsets = [0, 32], sizes = [8, 32], strides = [1, 1]} : vector<16x64xf32> to vector<8x32xf32>
    %18 = tpu.concatenate %14, %14, %14, %14 in 0 : vector<16x32xf32>, vector<16x32xf32>, vector<16x32xf32>, vector<16x32xf32> -> vector<64x32xf32>
    %19 = arith.mulf %18, %12 : vector<64x32xf32>
    %20 = tpu.concatenate %16, %16, %16, %16 in 0 : vector<8x32xf32>, vector<8x32xf32>, vector<8x32xf32>, vector<8x32xf32> -> vector<32x32xf32>
    %21 = arith.mulf %20, %13 : vector<32x32xf32>
    %cst_16 = arith.constant dense<0.000000e+00> : vector<64x8xf32>
    %22 = tpu.matmul %19, %16, %cst_16 {dimension_numbers = #tpu.dot_dimension_numbers<[1], [1], [0], [0], [0, 0, 1, 0], [], []>} : vector<64x32xf32>, vector<8x32xf32>, vector<64x8xf32> -> vector<64x8xf32>
    %cst_17 = arith.constant dense<0.000000e+00> : vector<32x16xf32>
    %23 = tpu.matmul %21, %14, %cst_17 {dimension_numbers = #tpu.dot_dimension_numbers<[1], [1], [0], [0], [0, 0, 1, 0], [], []>} : vector<32x32xf32>, vector<16x32xf32>, vector<32x16xf32> -> vector<32x16xf32>
    %cst_18 = arith.constant -5.000000e+04 : f32
    %24 = vector.broadcast %cst_18 : f32 to vector<64x8xf32>
    %25 = arith.maximumf %22, %24 : vector<64x8xf32>
    %cst_19 = arith.constant -5.000000e+04 : f32
    %26 = vector.broadcast %cst_19 : f32 to vector<32x16xf32>
    %27 = arith.maximumf %23, %26 : vector<32x16xf32>
    %cst_20 = arith.constant 5.000000e+04 : f32
    %28 = vector.broadcast %cst_20 : f32 to vector<64x8xf32>
    %29 = arith.minimumf %25, %28 : vector<64x8xf32>
    %cst_21 = arith.constant 5.000000e+04 : f32
    %30 = vector.broadcast %cst_21 : f32 to vector<32x16xf32>
    %31 = arith.minimumf %27, %30 : vector<32x16xf32>
    %cst_22 = arith.constant dense<0xFF800000> : vector<32xf32>
    %32 = vector.multi_reduction <maximumf>, %31, %cst_22 [1] : vector<32x16xf32> to vector<32xf32>
    %33 = vector.shape_cast %32 : vector<32xf32> to vector<32x1xf32>
    %34 = vector.broadcast %33 : vector<32x1xf32> to vector<32x16xf32>
    %35 = arith.subf %31, %34 : vector<32x16xf32>
    %cst_23 = arith.constant -5.000000e+04 : f32
    %36 = vector.broadcast %cst_23 : f32 to vector<32x16xf32>
    %37 = arith.maximumf %35, %36 : vector<32x16xf32>
    %38 = math.exp %37 : vector<32x16xf32>
    %cst_24 = arith.constant dense<0.000000e+00> : vector<32xf32>
    %39 = vector.multi_reduction <add>, %38, %cst_24 [1] : vector<32x16xf32> to vector<32xf32>
    %40 = vector.shape_cast %39 : vector<32xf32> to vector<32x1xf32>
    %41 = tpu.reciprocal %40 {approx = true} : vector<32x1xf32> -> vector<32x1xf32>
    %42 = vector.broadcast %41 : vector<32x1xf32> to vector<32x16xf32>
    %43 = arith.mulf %38, %42 : vector<32x16xf32>
    %cst_25 = arith.constant dense<0xFF800000> : vector<64xf32>
    %44 = vector.multi_reduction <maximumf>, %29, %cst_25 [1] : vector<64x8xf32> to vector<64xf32>
    %45 = vector.shape_cast %44 : vector<64xf32> to vector<64x1xf32>
    %46 = vector.broadcast %45 : vector<64x1xf32> to vector<64x8xf32>
    %47 = arith.subf %29, %46 : vector<64x8xf32>
    %48 = math.exp %47 : vector<64x8xf32>
    %cst_26 = arith.constant dense<0.000000e+00> : vector<64xf32>
    %49 = vector.multi_reduction <add>, %48, %cst_26 [1] : vector<64x8xf32> to vector<64xf32>
    %50 = vector.shape_cast %49 : vector<64xf32> to vector<64x1xf32>
    %51 = tpu.reciprocal %50 {approx = true} : vector<64x1xf32> -> vector<64x1xf32>
    %52 = vector.broadcast %51 : vector<64x1xf32> to vector<64x8xf32>
    %53 = arith.mulf %48, %52 : vector<64x8xf32>
    %cst_27 = arith.constant dense<0.000000e+00> : vector<64x32xf32>
    %54 = tpu.matmul %53, %17, %cst_27 {dimension_numbers = #tpu.dot_dimension_numbers<[1], [0], [0], [1], [0, 0, 1, 1], [], []>} : vector<64x8xf32>, vector<8x32xf32>, vector<64x32xf32> -> vector<64x32xf32>
    %55 = arith.mulf %54, %12 : vector<64x32xf32>
    %cst_28 = arith.constant dense<0.000000e+00> : vector<32x32xf32>
    %56 = tpu.matmul %43, %15, %cst_28 {dimension_numbers = #tpu.dot_dimension_numbers<[1], [0], [0], [1], [0, 0, 1, 1], [], []>} : vector<32x16xf32>, vector<16x32xf32>, vector<32x32xf32> -> vector<32x32xf32>
    %57 = arith.mulf %56, %13 : vector<32x32xf32>
    %58 = vector.extract_strided_slice %55 {offsets = [0, 0], sizes = [16, 32], strides = [1, 1]} : vector<64x32xf32> to vector<16x32xf32>
    %59 = vector.extract_strided_slice %57 {offsets = [0, 0], sizes = [8, 32], strides = [1, 1]} : vector<32x32xf32> to vector<8x32xf32>
    %60 = vector.extract_strided_slice %55 {offsets = [16, 0], sizes = [16, 32], strides = [1, 1]} : vector<64x32xf32> to vector<16x32xf32>
    %61 = arith.addf %58, %60 : vector<16x32xf32>
    %62 = vector.extract_strided_slice %57 {offsets = [8, 0], sizes = [8, 32], strides = [1, 1]} : vector<32x32xf32> to vector<8x32xf32>
    %63 = arith.addf %59, %62 : vector<8x32xf32>
    %64 = vector.extract_strided_slice %55 {offsets = [32, 0], sizes = [16, 32], strides = [1, 1]} : vector<64x32xf32> to vector<16x32xf32>
    %65 = arith.addf %61, %64 : vector<16x32xf32>
    %66 = vector.extract_strided_slice %57 {offsets = [16, 0], sizes = [8, 32], strides = [1, 1]} : vector<32x32xf32> to vector<8x32xf32>
    %67 = arith.addf %63, %66 : vector<8x32xf32>
    %68 = vector.extract_strided_slice %55 {offsets = [48, 0], sizes = [16, 32], strides = [1, 1]} : vector<64x32xf32> to vector<16x32xf32>
    %69 = arith.addf %65, %68 : vector<16x32xf32>
    %70 = vector.extract_strided_slice %57 {offsets = [24, 0], sizes = [8, 32], strides = [1, 1]} : vector<32x32xf32> to vector<8x32xf32>
    %71 = arith.addf %67, %70 : vector<8x32xf32>
    %72 = vector.extract_strided_slice %6 {offsets = [16, 0], sizes = [16, 32], strides = [1, 1]} : vector<32x64xf32> to vector<16x32xf32>
    %73 = vector.extract_strided_slice %6 {offsets = [16, 32], sizes = [16, 32], strides = [1, 1]} : vector<32x64xf32> to vector<16x32xf32>
    %74 = vector.extract_strided_slice %11 {offsets = [8, 0], sizes = [8, 32], strides = [1, 1]} : vector<16x64xf32> to vector<8x32xf32>
    %75 = vector.extract_strided_slice %11 {offsets = [8, 32], sizes = [8, 32], strides = [1, 1]} : vector<16x64xf32> to vector<8x32xf32>
    %76 = tpu.concatenate %72, %72, %72, %72 in 0 : vector<16x32xf32>, vector<16x32xf32>, vector<16x32xf32>, vector<16x32xf32> -> vector<64x32xf32>
    %77 = arith.mulf %76, %12 : vector<64x32xf32>
    %78 = tpu.concatenate %74, %74, %74, %74 in 0 : vector<8x32xf32>, vector<8x32xf32>, vector<8x32xf32>, vector<8x32xf32> -> vector<32x32xf32>
    %79 = arith.mulf %78, %13 : vector<32x32xf32>
    %cst_29 = arith.constant dense<0.000000e+00> : vector<64x8xf32>
    %80 = tpu.matmul %77, %74, %cst_29 {dimension_numbers = #tpu.dot_dimension_numbers<[1], [1], [0], [0], [0, 0, 1, 0], [], []>} : vector<64x32xf32>, vector<8x32xf32>, vector<64x8xf32> -> vector<64x8xf32>
    %cst_30 = arith.constant dense<0.000000e+00> : vector<32x16xf32>
    %81 = tpu.matmul %79, %72, %cst_30 {dimension_numbers = #tpu.dot_dimension_numbers<[1], [1], [0], [0], [0, 0, 1, 0], [], []>} : vector<32x32xf32>, vector<16x32xf32>, vector<32x16xf32> -> vector<32x16xf32>
    %cst_31 = arith.constant -5.000000e+04 : f32
    %82 = vector.broadcast %cst_31 : f32 to vector<64x8xf32>
    %83 = arith.maximumf %80, %82 : vector<64x8xf32>
    %cst_32 = arith.constant -5.000000e+04 : f32
    %84 = vector.broadcast %cst_32 : f32 to vector<32x16xf32>
    %85 = arith.maximumf %81, %84 : vector<32x16xf32>
    %cst_33 = arith.constant 5.000000e+04 : f32
    %86 = vector.broadcast %cst_33 : f32 to vector<64x8xf32>
    %87 = arith.minimumf %83, %86 : vector<64x8xf32>
    %cst_34 = arith.constant 5.000000e+04 : f32
    %88 = vector.broadcast %cst_34 : f32 to vector<32x16xf32>
    %89 = arith.minimumf %85, %88 : vector<32x16xf32>
    %cst_35 = arith.constant dense<0xFF800000> : vector<32xf32>
    %90 = vector.multi_reduction <maximumf>, %89, %cst_35 [1] : vector<32x16xf32> to vector<32xf32>
    %91 = vector.shape_cast %90 : vector<32xf32> to vector<32x1xf32>
    %92 = vector.broadcast %91 : vector<32x1xf32> to vector<32x16xf32>
    %93 = arith.subf %89, %92 : vector<32x16xf32>
    %cst_36 = arith.constant -5.000000e+04 : f32
    %94 = vector.broadcast %cst_36 : f32 to vector<32x16xf32>
    %95 = arith.maximumf %93, %94 : vector<32x16xf32>
    %96 = math.exp %95 : vector<32x16xf32>
    %cst_37 = arith.constant dense<0.000000e+00> : vector<32xf32>
    %97 = vector.multi_reduction <add>, %96, %cst_37 [1] : vector<32x16xf32> to vector<32xf32>
    %98 = vector.shape_cast %97 : vector<32xf32> to vector<32x1xf32>
    %99 = tpu.reciprocal %98 {approx = true} : vector<32x1xf32> -> vector<32x1xf32>
    %100 = vector.broadcast %99 : vector<32x1xf32> to vector<32x16xf32>
    %101 = arith.mulf %96, %100 : vector<32x16xf32>
    %cst_38 = arith.constant dense<0xFF800000> : vector<64xf32>
    %102 = vector.multi_reduction <maximumf>, %87, %cst_38 [1] : vector<64x8xf32> to vector<64xf32>
    %103 = vector.shape_cast %102 : vector<64xf32> to vector<64x1xf32>
    %104 = vector.broadcast %103 : vector<64x1xf32> to vector<64x8xf32>
    %105 = arith.subf %87, %104 : vector<64x8xf32>
    %106 = math.exp %105 : vector<64x8xf32>
    %cst_39 = arith.constant dense<0.000000e+00> : vector<64xf32>
    %107 = vector.multi_reduction <add>, %106, %cst_39 [1] : vector<64x8xf32> to vector<64xf32>
    %108 = vector.shape_cast %107 : vector<64xf32> to vector<64x1xf32>
    %109 = tpu.reciprocal %108 {approx = true} : vector<64x1xf32> -> vector<64x1xf32>
    %110 = vector.broadcast %109 : vector<64x1xf32> to vector<64x8xf32>
    %111 = arith.mulf %106, %110 : vector<64x8xf32>
    %cst_40 = arith.constant dense<0.000000e+00> : vector<64x32xf32>
    %112 = tpu.matmul %111, %75, %cst_40 {dimension_numbers = #tpu.dot_dimension_numbers<[1], [0], [0], [1], [0, 0, 1, 1], [], []>} : vector<64x8xf32>, vector<8x32xf32>, vector<64x32xf32> -> vector<64x32xf32>
    %113 = arith.mulf %112, %12 : vector<64x32xf32>
    %cst_41 = arith.constant dense<0.000000e+00> : vector<32x32xf32>
    %114 = tpu.matmul %101, %73, %cst_41 {dimension_numbers = #tpu.dot_dimension_numbers<[1], [0], [0], [1], [0, 0, 1, 1], [], []>} : vector<32x16xf32>, vector<16x32xf32>, vector<32x32xf32> -> vector<32x32xf32>
    %115 = arith.mulf %114, %13 : vector<32x32xf32>
    %116 = vector.extract_strided_slice %113 {offsets = [0, 0], sizes = [16, 32], strides = [1, 1]} : vector<64x32xf32> to vector<16x32xf32>
    %117 = vector.extract_strided_slice %115 {offsets = [0, 0], sizes = [8, 32], strides = [1, 1]} : vector<32x32xf32> to vector<8x32xf32>
    %118 = vector.extract_strided_slice %113 {offsets = [16, 0], sizes = [16, 32], strides = [1, 1]} : vector<64x32xf32> to vector<16x32xf32>
    %119 = arith.addf %116, %118 : vector<16x32xf32>
    %120 = vector.extract_strided_slice %115 {offsets = [8, 0], sizes = [8, 32], strides = [1, 1]} : vector<32x32xf32> to vector<8x32xf32>
    %121 = arith.addf %117, %120 : vector<8x32xf32>
    %122 = vector.extract_strided_slice %113 {offsets = [32, 0], sizes = [16, 32], strides = [1, 1]} : vector<64x32xf32> to vector<16x32xf32>
    %123 = arith.addf %119, %122 : vector<16x32xf32>
    %124 = vector.extract_strided_slice %115 {offsets = [16, 0], sizes = [8, 32], strides = [1, 1]} : vector<32x32xf32> to vector<8x32xf32>
    %125 = arith.addf %121, %124 : vector<8x32xf32>
    %126 = vector.extract_strided_slice %113 {offsets = [48, 0], sizes = [16, 32], strides = [1, 1]} : vector<64x32xf32> to vector<16x32xf32>
    %127 = arith.addf %123, %126 : vector<16x32xf32>
    %128 = vector.extract_strided_slice %115 {offsets = [24, 0], sizes = [8, 32], strides = [1, 1]} : vector<32x32xf32> to vector<8x32xf32>
    %129 = arith.addf %125, %128 : vector<8x32xf32>
    %130 = tpu.concatenate %69, %127 in 0 : vector<16x32xf32>, vector<16x32xf32> -> vector<32x32xf32>
    %131 = tpu.concatenate %71, %129 in 0 : vector<8x32xf32>, vector<8x32xf32> -> vector<16x32xf32>
    %c0_42 = arith.constant 0 : index
    %c0_43 = arith.constant 0 : index
    %132 = vector.load %arg7[%c0_42, %c0_43] : memref<32x32xf32, #tpu.memory_space<vmem>>, vector<32x32xf32>
    %cst_44 = arith.constant dense<0.000000e+00> : vector<32x32xf32>
    %133 = tpu.matmul %130, %132, %cst_44 {dimension_numbers = #tpu.dot_dimension_numbers<[1], [0], [0], [1], [0, 0, 1, 1], [], []>} : vector<32x32xf32>, vector<32x32xf32>, vector<32x32xf32> -> vector<32x32xf32>
    %c0_45 = arith.constant 0 : index
    %c0_46 = arith.constant 0 : index
    %134 = vector.load %arg8[%c0_45, %c0_46] : memref<1x32xf32, #tpu.memory_space<vmem>>, vector<1x32xf32>
    %135 = vector.broadcast %134 : vector<1x32xf32> to vector<32x32xf32>
    %136 = arith.addf %133, %135 : vector<32x32xf32>
    %c0_47 = arith.constant 0 : index
    %c0_48 = arith.constant 0 : index
    %137 = vector.load %arg9[%c0_47, %c0_48] : memref<32x32xf32, #tpu.memory_space<vmem>>, vector<32x32xf32>
    %cst_49 = arith.constant dense<0.000000e+00> : vector<16x32xf32>
    %138 = tpu.matmul %131, %137, %cst_49 {dimension_numbers = #tpu.dot_dimension_numbers<[1], [0], [0], [1], [0, 0, 1, 1], [], []>} : vector<16x32xf32>, vector<32x32xf32>, vector<16x32xf32> -> vector<16x32xf32>
    %c0_50 = arith.constant 0 : index
    %c0_51 = arith.constant 0 : index
    %139 = vector.load %arg10[%c0_50, %c0_51] : memref<1x32xf32, #tpu.memory_space<vmem>>, vector<1x32xf32>
    %140 = vector.broadcast %139 : vector<1x32xf32> to vector<16x32xf32>
    %141 = arith.addf %138, %140 : vector<16x32xf32>
    %c0_52 = arith.constant 0 : index
    %c0_53 = arith.constant 0 : index
    %142 = vector.load %arg13[%c0_52, %c0_53] : memref<32x32xf32, #tpu.memory_space<vmem>>, vector<32x32xf32>
    tpu.vector_store %arg13[%c0_52, %c0_53], %136 {strides = array<i32>} : memref<32x32xf32, #tpu.memory_space<vmem>>, vector<32x32xf32>,
    %c0_54 = arith.constant 0 : index
    %c0_55 = arith.constant 0 : index
    %143 = vector.load %arg14[%c0_54, %c0_55] : memref<16x32xf32, #tpu.memory_space<vmem>>, vector<16x32xf32>
    tpu.vector_store %arg14[%c0_54, %c0_55], %141 {strides = array<i32>} : memref<16x32xf32, #tpu.memory_space<vmem>>, vector<16x32xf32>,
    return
  }
  func.func @transform_0(%arg0: i32) -> (i32, i32) {
    %c0_i32 = arith.constant 0 : i32
    %c0_i32_0 = arith.constant 0 : i32
    %c0_i32_1 = arith.constant 0 : i32
    return %c0_i32, %c0_i32_0 : i32, i32
  }
  func.func @transform_1(%arg0: i32) -> (i32, i32) {
    %c0_i32 = arith.constant 0 : i32
    %c0_i32_0 = arith.constant 0 : i32
    %c0_i32_1 = arith.constant 0 : i32
    return %c0_i32, %c0_i32_0 : i32, i32
  }
  func.func @transform_2(%arg0: i32) -> (i32, i32) {
    %c0_i32 = arith.constant 0 : i32
    %c0_i32_0 = arith.constant 0 : i32
    %c0_i32_1 = arith.constant 0 : i32
    return %c0_i32, %c0_i32_0 : i32, i32
  }
  func.func @transform_3(%arg0: i32) -> (i32, i32) {
    %c0_i32 = arith.constant 0 : i32
    %c0_i32_0 = arith.constant 0 : i32
    %c0_i32_1 = arith.constant 0 : i32
    return %c0_i32, %c0_i32_0 : i32, i32
  }
  func.func @transform_4(%arg0: i32) -> (i32, i32) {
    %c0_i32 = arith.constant 0 : i32
    %c0_i32_0 = arith.constant 0 : i32
    %c0_i32_1 = arith.constant 0 : i32
    return %c0_i32, %c0_i32_0 : i32, i32
  }
  func.func @transform_5(%arg0: i32) -> (i32, i32) {
    %c0_i32 = arith.constant 0 : i32
    %c0_i32_0 = arith.constant 0 : i32
    %c0_i32_1 = arith.constant 0 : i32
    return %c0_i32, %c0_i32_0 : i32, i32
  }
  func.func @transform_6(%arg0: i32) -> (i32, i32) {
    %c0_i32 = arith.constant 0 : i32
    %c0_i32_0 = arith.constant 0 : i32
    %c0_i32_1 = arith.constant 0 : i32
    return %c0_i32, %c0_i32_0 : i32, i32
  }
  func.func @transform_7(%arg0: i32) -> (i32, i32) {
    %c0_i32 = arith.constant 0 : i32
    %c0_i32_0 = arith.constant 0 : i32
    %c0_i32_1 = arith.constant 0 : i32
    return %c0_i32, %c0_i32_0 : i32, i32
  }
  func.func @transform_8(%arg0: i32) -> (i32, i32) {
    %c0_i32 = arith.constant 0 : i32
    %c0_i32_0 = arith.constant 0 : i32
    %c0_i32_1 = arith.constant 0 : i32
    return %c0_i32, %c0_i32_0 : i32, i32
  }
  func.func @transform_9(%arg0: i32) -> (i32, i32) {
    %c0_i32 = arith.constant 0 : i32
    %c0_i32_0 = arith.constant 0 : i32
    %c0_i32_1 = arith.constant 0 : i32
    return %c0_i32, %c0_i32_0 : i32, i32
  }
  func.func @transform_10(%arg0: i32) -> (i32, i32) {
    %c0_i32 = arith.constant 0 : i32
    %c0_i32_0 = arith.constant 0 : i32
    %c0_i32_1 = arith.constant 0 : i32
    return %c0_i32, %c0_i32_0 : i32, i32
  }
  func.func @transform_11(%arg0: i32) -> (i32, i32) {
    %c0_i32 = arith.constant 0 : i32
    %c0_i32_0 = arith.constant 0 : i32
    %c0_i32_1 = arith.constant 0 : i32
    return %c0_i32, %c0_i32_0 : i32, i32
  }
  func.func @transform_12(%arg0: i32) -> (i32, i32) {
    %c0_i32 = arith.constant 0 : i32
    %c0_i32_0 = arith.constant 0 : i32
    %c0_i32_1 = arith.constant 0 : i32
    return %c0_i32, %c0_i32_0 : i32, i32
  }
  func.func @transform_13(%arg0: i32) -> (i32, i32) {
    %c0_i32 = arith.constant 0 : i32
    %c0_i32_0 = arith.constant 0 : i32
    %c0_i32_1 = arith.constant 0 : i32
    return %c0_i32, %c0_i32_0 : i32, i32
  }
}

</mosaic_0001>

<llo_original>
// kernel: tpu_custom_call.1
$region0: #{tpu_custom_call.1}
  #allocation0 [shape = 'u32[]', space=smem, size = 0x4, offset = 0x4, fixed_abs, tag = 'smem constant byte address 0x4 - core index']
  #allocation1 [shape = 'u32[144,128]{1,0:T(1,128)}', space=vmem, size = 0x12000, scoped, tag = 'internal scratch']
  %s0 = inlined_call_operand.vmem [shape: f32[32,32], index: 0, kind: input, shape index: {}]
  %s1 = inlined_call_operand.hbm [shape: f32[16,32], index: 1, kind: input, shape index: {}]
  %s2 = inlined_call_operand.vmem [shape: f32[32,64], index: 2, kind: input, shape index: {}]
  %s3 = inlined_call_operand.vmem [shape: f32[1,64], index: 3, kind: input, shape index: {}]
  %s4 = inlined_call_operand.vmem [shape: f32[32,64], index: 4, kind: input, shape index: {}]
  %s5 = inlined_call_operand.vmem [shape: f32[1,64], index: 5, kind: input, shape index: {}]
  %s6 = inlined_call_operand.hbm [shape: f32[32,32], index: 6, kind: input, shape index: {}]
  %s7 = inlined_call_operand.vmem [shape: f32[1,32], index: 7, kind: input, shape index: {}]
  %s8 = inlined_call_operand.hbm [shape: f32[32,32], index: 8, kind: input, shape index: {}]
  %s9 = inlined_call_operand.vmem [shape: f32[1,32], index: 9, kind: input, shape index: {}]
  %s10 = inlined_call_operand.vmem [shape: f32[64,32], index: 10, kind: input, shape index: {}]
  %s11 = inlined_call_operand.hbm [shape: f32[32,32], index: 11, kind: input, shape index: {}]
  %s12 = inlined_call_operand.hbm [shape: f32[32,32], index: 12, kind: output, shape index: {0}]
  %s13 = inlined_call_operand.hbm [shape: f32[16,32], index: 13, kind: output, shape index: {1}]
  %14 = xla_tuple %s12, %s13
  %s15 = sld [smem:[#allocation0]]
  $region82: #{tpu_custom_call.1} parent=0
    _
  %s17 = ssub.s32 1, %s15
  %s18 = scalar_select 0, %s17, %s15
  $region1: #{tpu_custom_call.1} parent=0
    #allocation2 [shape = 'u8[8192]{0}', space=vmem, size = 0x2000, scoped, tag = 'input window, operand 1, single buffered']
    #allocation3 [shape = 's32[1]{0}', space=sflag, size = 0x4, scoped, tag = 'scoped memory for tpu_custom_call.1']
    #allocation4 [shape = 's32[1]{0}', space=sflag, size = 0x4, scoped, tag = 'scoped memory for tpu_custom_call.1']
    #allocation5 [shape = 'u8[16384]{0}', space=vmem, size = 0x4000, scoped, tag = 'input window, operand 6, single buffered']
    #allocation6 [shape = 's32[1]{0}', space=sflag, size = 0x4, scoped, tag = 'scoped memory for tpu_custom_call.1']
    #allocation7 [shape = 'u8[16384]{0}', space=vmem, size = 0x4000, scoped, tag = 'input window, operand 8, single buffered']
    #allocation8 [shape = 'u8[16384]{0}', space=vmem, size = 0x4000, scoped, tag = 'input window, operand 11, single buffered']
    #allocation9 [shape = 's32[1]{0}', space=sflag, size = 0x4, scoped, tag = 'scoped memory for tpu_custom_call.1']
    #allocation10 [shape = 'u8[16384]{0}', space=vmem, size = 0x4000, scoped, tag = 'output window, operand 0, single buffered']
    #allocation11 [shape = 'u8[8192]{0}', space=vmem, size = 0x2000, scoped, tag = 'output window, operand 1, single buffered']
    #allocation12 [shape = 's32[1]{0}', space=sflag, size = 0x4, scoped, tag = 'scoped memory for tpu_custom_call.1']
    %19 = vsyncpa [#allocation3], 0
    %20 = vsyncpa [#allocation6], 0
    %21 = vsyncpa [#allocation9], 0
    %22 = vsyncpa [#allocation4], 0
    %23 = vsyncpa [#allocation12], 0
    // Predicated region
    $region2: #{tpu_custom_call.1} parent=1 // pred_check
      _
    $region3: #{tpu_custom_call.1} parent=1 // pred_check_branch
      %25 = sbr.rel (0) target = $region5
    $region4: #{tpu_custom_call.1} parent=1 // pred_region
      _
    $region5: #{tpu_custom_call.1} parent=1 // pred_fallthru
      _
    // Predicated region
    $region6: #{tpu_custom_call.1} parent=1 // pred_check
      _
    $region7: #{tpu_custom_call.1} parent=1 // pred_check_branch
      %27 = sbr.rel (0) target = $region9
    $region8: #{tpu_custom_call.1} parent=1 // pred_region
      %s29 = ssub.s32 256, 256
      %30 = vsyncadd [#allocation3], %s29
      %s31 = sshll.u32 [#allocation2], 4
      %s32 = int_to_ptr.vmem [resolvable:$true] %s31
      %37 = dma.hbm_to_vmem [thread:$0]  %s1, 256, %s32, [#allocation3], 128, 128, 8
    $region9: #{tpu_custom_call.1} parent=1 // pred_fallthru
      _
    // Predicated region
    $region10: #{tpu_custom_call.1} parent=1 // pred_check
      _
    $region11: #{tpu_custom_call.1} parent=1 // pred_check_branch
      %39 = sbr.rel (0) target = $region13
    $region12: #{tpu_custom_call.1} parent=1 // pred_region
      _
    $region13: #{tpu_custom_call.1} parent=1 // pred_fallthru
      _
    // Predicated region
    $region14: #{tpu_custom_call.1} parent=1 // pred_check
      _
    $region15: #{tpu_custom_call.1} parent=1 // pred_check_branch
      %41 = sbr.rel (0) target = $region17
    $region16: #{tpu_custom_call.1} parent=1 // pred_region
      _
    $region17: #{tpu_custom_call.1} parent=1 // pred_fallthru
      _
    // Predicated region
    $region18: #{tpu_custom_call.1} parent=1 // pred_check
      _
    $region19: #{tpu_custom_call.1} parent=1 // pred_check_branch
      %43 = sbr.rel (0) target = $region21
    $region20: #{tpu_custom_call.1} parent=1 // pred_region
      _
    $region21: #{tpu_custom_call.1} parent=1 // pred_fallthru
      _
    // Predicated region
    $region22: #{tpu_custom_call.1} parent=1 // pred_check
      _
    $region23: #{tpu_custom_call.1} parent=1 // pred_check_branch
      %45 = sbr.rel (0) target = $region25
    $region24: #{tpu_custom_call.1} parent=1 // pred_region
      _
    $region25: #{tpu_custom_call.1} parent=1 // pred_fallthru
      _
    // Predicated region
    $region26: #{tpu_custom_call.1} parent=1 // pred_check
      _
    $region27: #{tpu_custom_call.1} parent=1 // pred_check_branch
      %47 = sbr.rel (0) target = $region29
    $region28: #{tpu_custom_call.1} parent=1 // pred_region
      %s49 = ssub.s32 512, 512
      %50 = vsyncadd [#allocation6], %s49
      %s51 = sshll.u32 [#allocation5], 4
      %s52 = int_to_ptr.vmem [resolvable:$true] %s51
      %57 = dma.hbm_to_vmem [thread:$0]  %s6, 512, %s52, [#allocation6], 128, 128, 8
    $region29: #{tpu_custom_call.1} parent=1 // pred_fallthru
      _
    // Predicated region
    $region30: #{tpu_custom_call.1} parent=1 // pred_check
      _
    $region31: #{tpu_custom_call.1} parent=1 // pred_check_branch
      %59 = sbr.rel (0) target = $region33
    $region32: #{tpu_custom_call.1} parent=1 // pred_region
      _
    $region33: #{tpu_custom_call.1} parent=1 // pred_fallthru
      _
    // Predicated region
    $region34: #{tpu_custom_call.1} parent=1 // pred_check
      _
    $region35: #{tpu_custom_call.1} parent=1 // pred_check_branch
      %61 = sbr.rel (0) target = $region37
    $region36: #{tpu_custom_call.1} parent=1 // pred_region
      %s63 = ssub.s32 512, 512
      %64 = vsyncadd [#allocation6], %s63
      %s65 = sshll.u32 [#allocation7], 4
      %s66 = int_to_ptr.vmem [resolvable:$true] %s65
      %71 = dma.hbm_to_vmem [thread:$0]  %s8, 512, %s66, [#allocation6], 128, 128, 8
    $region37: #{tpu_custom_call.1} parent=1 // pred_fallthru
      _
    // Predicated region
    $region38: #{tpu_custom_call.1} parent=1 // pred_check
      _
    $region39: #{tpu_custom_call.1} parent=1 // pred_check_branch
      %73 = sbr.rel (0) target = $region41
    $region40: #{tpu_custom_call.1} parent=1 // pred_region
      _
    $region41: #{tpu_custom_call.1} parent=1 // pred_fallthru
      _
    // Predicated region
    $region42: #{tpu_custom_call.1} parent=1 // pred_check
      _
    $region43: #{tpu_custom_call.1} parent=1 // pred_check_branch
      %75 = sbr.rel (0) target = $region45
    $region44: #{tpu_custom_call.1} parent=1 // pred_region
      _
    $region45: #{tpu_custom_call.1} parent=1 // pred_fallthru
      _
    // Predicated region
    $region46: #{tpu_custom_call.1} parent=1 // pred_check
      _
    $region47: #{tpu_custom_call.1} parent=1 // pred_check_branch
      %77 = sbr.rel (0) target = $region49
    $region48: #{tpu_custom_call.1} parent=1 // pred_region
      %s79 = ssub.s32 512, 512
      %80 = vsyncadd [#allocation9], %s79
      %s81 = sshll.u32 [#allocation8], 4
      %s82 = int_to_ptr.vmem [resolvable:$true] %s81
      %87 = dma.hbm_to_vmem [thread:$0]  %s11, 512, %s82, [#allocation9], 128, 128, 8
    $region49: #{tpu_custom_call.1} parent=1 // pred_fallthru
      _
    // Predicated region
    $region50: #{tpu_custom_call.1} parent=1 // pred_check
      _
    $region51: #{tpu_custom_call.1} parent=1 // pred_check_branch
      %89 = sbr.rel (0) target = $region53
    $region52: #{tpu_custom_call.1} parent=1 // pred_region
      %90 = dma.done [#allocation3], 256
    $region53: #{tpu_custom_call.1} parent=1 // pred_fallthru
      _
    // Predicated region
    $region54: #{tpu_custom_call.1} parent=1 // pred_check
      _
    $region55: #{tpu_custom_call.1} parent=1 // pred_check_branch
      %92 = sbr.rel (0) target = $region57
    $region56: #{tpu_custom_call.1} parent=1 // pred_region
      %93 = dma.done [#allocation6], 512
    $region57: #{tpu_custom_call.1} parent=1 // pred_fallthru
      _
    // Predicated region
    $region58: #{tpu_custom_call.1} parent=1 // pred_check
      _
    $region59: #{tpu_custom_call.1} parent=1 // pred_check_branch
      %95 = sbr.rel (0) target = $region61
    $region60: #{tpu_custom_call.1} parent=1 // pred_region
      %96 = dma.done [#allocation6], 512
    $region61: #{tpu_custom_call.1} parent=1 // pred_fallthru
      _
    // Predicated region
    $region62: #{tpu_custom_call.1} parent=1 // pred_check
      _
    $region63: #{tpu_custom_call.1} parent=1 // pred_check_branch
      %98 = sbr.rel (0) target = $region65
    $region64: #{tpu_custom_call.1} parent=1 // pred_region
      %99 = dma.done [#allocation9], 512
    $region65: #{tpu_custom_call.1} parent=1 // pred_fallthru
      _
    %v100 = vld [vmem:[%s0] sm:$0xff]
    %v101 = vld [vmem:[%s0 + $0x8] sm:$0xff]
    %v102 = vld [vmem:[%s0 + $0x10] sm:$0xff]
    %v103 = vld [vmem:[%s0 + $0x18] sm:$0xff]
    %v104 = vld [vmem:[#allocation2] sm:$0xff]
    %v105 = vld [vmem:[#allocation2 + $0x8] sm:$0xff]
    %v106 = vld [vmem:[%s2] sm:$0xff]
    %v107 = vld [vmem:[%s2 + $0x8] sm:$0xff]
    %v108 = vld [vmem:[%s2 + $0x10] sm:$0xff]
    %v109 = vld [vmem:[%s2 + $0x18] sm:$0xff]
    %v110 = vld [vmem:[%s3] sm:$0x1]
    %v112 = vlaneseq
    %v113 = vshrl.u32 %v112, 7
    %v114 = vsub.s32 0, %v113
    %v115 = vrot.slane %v110, %v114
    %vm117 = vcmask 261120
    %v119 = vsel %vm117, %v100, 0
    %v122 = vsel %vm117, %v101, 0
    %v125 = vsel %vm117, %v102, 0
    %v128 = vsel %vm117, %v103, 0
    %130 = vmatprep.subr.mxu0 0.0
    %131 = vmatpush1.msra.mxu0 0.0
    %132 = vmatprep.subr.mxu0 0.0
    %133 = vmatpush1.msra.mxu0 0.0
    %134 = vmatprep.subr.mxu0 0.0
    %135 = vmatpush1.msra.mxu0 0.0
    %136 = vmatprep.subr.mxu0 0.0
    %137 = vmatpush1.msra.mxu0 0.0
    %138 = vmatprep.subr.mxu0 0.0
    %139 = vmatpush1.msra.mxu0 0.0
    %140 = vmatprep.subr.mxu0 0.0
    %141 = vmatpush1.msra.mxu0 0.0
    %142 = vmatprep.subr.mxu0 0.0
    %143 = vmatpush1.msra.mxu0 0.0
    %144 = vmatprep.subr.mxu0 0.0
    %145 = vmatpush1.msra.mxu0 0.0
    %146 = vmatprep.subr.mxu0 0.0
    %147 = vmatpush1.msra.mxu0 0.0
    %148 = vmatprep.subr.mxu0 0.0
    %149 = vmatpush1.msra.mxu0 0.0
    %150 = vmatprep.subr.mxu0 0.0
    %151 = vmatpush1.msra.mxu0 0.0
    %152 = vmatprep.subr.mxu0 0.0
    %153 = vmatpush1.msra.mxu0 0.0
    %154 = vmatprep.subr.mxu0 0.0
    %155 = vmatpush1.msra.mxu0 %v109
    %156 = vmatprep.subr.mxu0 0.0
    %157 = vmatpush1.msra.mxu0 %v108
    %158 = vmatprep.subr.mxu0 0.0
    %159 = vmatpush1.msra.mxu0 %v107
    %160 = vmatprep.subr.mxu0 0.0
    %161 = vmatpush1.msra.mxu0 %v106
    %162 = vmatprep.subr.mxu0 0.0
    %163 = vmatpush2.msra.mxu0 0.0
    %164 = vmatprep.subr.mxu0 0.0
    %165 = vmatpush2.msra.mxu0 0.0
    %166 = vmatprep.subr.mxu0 0.0
    %167 = vmatpush2.msra.mxu0 0.0
    %168 = vmatprep.subr.mxu0 0.0
    %169 = vmatpush2.msra.mxu0 0.0
    %170 = vmatprep.subr.mxu0 0.0
    %171 = vmatpush2.msra.mxu0 0.0
    %172 = vmatprep.subr.mxu0 0.0
    %173 = vmatpush2.msra.mxu0 0.0
    %174 = vmatprep.subr.mxu0 0.0
    %175 = vmatpush2.msra.mxu0 0.0
    %176 = vmatprep.subr.mxu0 0.0
    %177 = vmatpush2.msra.mxu0 0.0
    %178 = vmatprep.subr.mxu0 0.0
    %179 = vmatpush2.msra.mxu0 0.0
    %180 = vmatprep.subr.mxu0 0.0
    %181 = vmatpush2.msra.mxu0 0.0
    %182 = vmatprep.subr.mxu0 0.0
    %183 = vmatpush2.msra.mxu0 0.0
    %184 = vmatprep.subr.mxu0 0.0
    %185 = vmatpush2.msra.mxu0 0.0
    %186 = vmatprep.subr.mxu0 0.0
    %187 = vmatpush2.msra.mxu0 0.0
    %188 = vmatprep.subr.mxu0 0.0
    %189 = vmatpush2.msra.mxu0 0.0
    %190 = vmatprep.subr.mxu0 0.0
    %191 = vmatpush2.msra.mxu0 0.0
    %192 = vmatprep.subr.mxu0 0.0
    %193 = vmatpush2.msra.mxu0 0.0
    %194 = vmatprep.mubr.f32.mxu0 0.0
    %195 = vmatmul.mubr.f32.gmra.mxu0 %v119
    %v196 = vpop.f32.mrf.mxu0
    %v197 = vadd.f32 %v115, %v196
    %v198 = vpop.f32.mrf.mxu0
    %199 = vmatprep.mubr.f32.mxu0 0.0
    %200 = vmatmul.mubr.f32.gmra.mxu0 %v122
    %v201 = vpop.f32.mrf.mxu0
    %v202 = vadd.f32 %v115, %v201
    %v203 = vpop.f32.mrf.mxu0
    %204 = vmatprep.mubr.f32.mxu0 0.0
    %205 = vmatmul.mubr.f32.gmra.mxu0 %v125
    %v206 = vpop.f32.mrf.mxu0
    %v207 = vadd.f32 %v115, %v206
    %v208 = vpop.f32.mrf.mxu0
    %209 = vmatprep.mubr.f32.mxu0 0.0
    %210 = vmatmul.mubr.f32.gmra.mxu0 %v128
    %v211 = vpop.f32.mrf.mxu0
    %v212 = vadd.f32 %v115, %v211
    %v213 = vpop.f32.mrf.mxu0
    %214 = vdwg.mxu0
    %v215 = vld [vmem:[%s4] sm:$0xff]
    %v216 = vld [vmem:[%s4 + $0x8] sm:$0xff]
    %v217 = vld [vmem:[%s4 + $0x10] sm:$0xff]
    %v218 = vld [vmem:[%s4 + $0x18] sm:$0xff]
    %v219 = vld [vmem:[%s5] sm:$0x1]
    %v221 = vlaneseq
    %v222 = vshrl.u32 %v221, 7
    %v223 = vsub.s32 0, %v222
    %v224 = vrot.slane %v219, %v223
    %v227 = vsel %vm117, %v104, 0
    %v230 = vsel %vm117, %v105, 0
    %232 = vmatprep.subr.mxu0 0.0
    %233 = vmatpush1.msra.mxu0 0.0
    %234 = vmatprep.subr.mxu0 0.0
    %235 = vmatpush1.msra.mxu0 0.0
    %236 = vmatprep.subr.mxu0 0.0
    %237 = vmatpush1.msra.mxu0 0.0
    %238 = vmatprep.subr.mxu0 0.0
    %239 = vmatpush1.msra.mxu0 0.0
    %240 = vmatprep.subr.mxu0 0.0
    %241 = vmatpush1.msra.mxu0 0.0
    %242 = vmatprep.subr.mxu0 0.0
    %243 = vmatpush1.msra.mxu0 0.0
    %244 = vmatprep.subr.mxu0 0.0
    %245 = vmatpush1.msra.mxu0 0.0
    %246 = vmatprep.subr.mxu0 0.0
    %247 = vmatpush1.msra.mxu0 0.0
    %248 = vmatprep.subr.mxu0 0.0
    %249 = vmatpush1.msra.mxu0 0.0
    %250 = vmatprep.subr.mxu0 0.0
    %251 = vmatpush1.msra.mxu0 0.0
    %252 = vmatprep.subr.mxu0 0.0
    %253 = vmatpush1.msra.mxu0 0.0
    %254 = vmatprep.subr.mxu0 0.0
    %255 = vmatpush1.msra.mxu0 0.0
    %256 = vmatprep.subr.mxu0 0.0
    %257 = vmatpush1.msra.mxu0 %v218
    %258 = vmatprep.subr.mxu0 0.0
    %259 = vmatpush1.msra.mxu0 %v217
    %260 = vmatprep.subr.mxu0 0.0
    %261 = vmatpush1.msra.mxu0 %v216
    %262 = vmatprep.subr.mxu0 0.0
    %263 = vmatpush1.msra.mxu0 %v215
    %264 = vmatprep.subr.mxu0 0.0
    %265 = vmatpush2.msra.mxu0 0.0
    %266 = vmatprep.subr.mxu0 0.0
    %267 = vmatpush2.msra.mxu0 0.0
    %268 = vmatprep.subr.mxu0 0.0
    %269 = vmatpush2.msra.mxu0 0.0
    %270 = vmatprep.subr.mxu0 0.0
    %271 = vmatpush2.msra.mxu0 0.0
    %272 = vmatprep.subr.mxu0 0.0
    %273 = vmatpush2.msra.mxu0 0.0
    %274 = vmatprep.subr.mxu0 0.0
    %275 = vmatpush2.msra.mxu0 0.0
    %276 = vmatprep.subr.mxu0 0.0
    %277 = vmatpush2.msra.mxu0 0.0
    %278 = vmatprep.subr.mxu0 0.0
    %279 = vmatpush2.msra.mxu0 0.0
    %280 = vmatprep.subr.mxu0 0.0
    %281 = vmatpush2.msra.mxu0 0.0
    %282 = vmatprep.subr.mxu0 0.0
    %283 = vmatpush2.msra.mxu0 0.0
    %284 = vmatprep.subr.mxu0 0.0
    %285 = vmatpush2.msra.mxu0 0.0
    %286 = vmatprep.subr.mxu0 0.0
    %287 = vmatpush2.msra.mxu0 0.0
    %288 = vmatprep.subr.mxu0 0.0
    %289 = vmatpush2.msra.mxu0 0.0
    %290 = vmatprep.subr.mxu0 0.0
    %291 = vmatpush2.msra.mxu0 0.0
    %292 = vmatprep.subr.mxu0 0.0
    %293 = vmatpush2.msra.mxu0 0.0
    %294 = vmatprep.subr.mxu0 0.0
    %295 = vmatpush2.msra.mxu0 0.0
    %296 = vmatprep.mubr.f32.mxu0 0.0
    %297 = vmatmul.mubr.f32.gmra.mxu0 %v227
    %v298 = vpop.f32.mrf.mxu0
    %v299 = vadd.f32 %v224, %v298
    %v300 = vpop.f32.mrf.mxu0
    %301 = vmatprep.mubr.f32.mxu0 0.0
    %302 = vmatmul.mubr.f32.gmra.mxu0 %v230
    %v303 = vpop.f32.mrf.mxu0
    %v304 = vadd.f32 %v224, %v303
    %v305 = vpop.f32.mrf.mxu0
    %306 = vdwg.mxu0
    %v307 = vld [vmem:[%s10] sm:$0xff]
    %v308 = vld [vmem:[%s10 + $0x8] sm:$0xff]
    %v309 = vld [vmem:[%s10 + $0x10] sm:$0xff]
    %v310 = vld [vmem:[%s10 + $0x18] sm:$0xff]
    %v311 = vld [vmem:[%s10 + $0x20] sm:$0xff]
    %v312 = vld [vmem:[%s10 + $0x28] sm:$0xff]
    %v313 = vld [vmem:[%s10 + $0x30] sm:$0xff]
    %v314 = vld [vmem:[%s10 + $0x38] sm:$0xff]
    %v315 = vld [vmem:[#allocation8] sm:$0xff]
    %v316 = vld [vmem:[#allocation8 + $0x8] sm:$0xff]
    %v317 = vld [vmem:[#allocation8 + $0x10] sm:$0xff]
    %v318 = vld [vmem:[#allocation8 + $0x18] sm:$0xff]
    %v319 = vmul.f32 %v197, %v307
    %v320 = vmul.f32 %v202, %v308
    %v321 = vmul.f32 %v197, %v309
    %v322 = vmul.f32 %v202, %v310
    %v323 = vmul.f32 %v197, %v311
    %v324 = vmul.f32 %v202, %v312
    %v325 = vmul.f32 %v197, %v313
    %v326 = vmul.f32 %v202, %v314
    %v327 = vmul.f32 %v299, %v315
    %v328 = vmul.f32 %v299, %v316
    %v329 = vmul.f32 %v299, %v317
    %v330 = vmul.f32 %v299, %v318
    %v332 = vsel %vm117, %v319, 0
    %v335 = vsel %vm117, %v320, 0
    %v338 = vsel %vm117, %v321, 0
    %v341 = vsel %vm117, %v322, 0
    %v344 = vsel %vm117, %v323, 0
    %v347 = vsel %vm117, %v324, 0
    %v350 = vsel %vm117, %v325, 0
    %v353 = vsel %vm117, %v326, 0
    %v356 = vsel %vm117, %v299, 0
    %358 = vmatprep.subr.mxu0 0.0
    %359 = vmatpush1.xpose.msra.mxu0 0.0
    %360 = vmatprep.subr.mxu0 0.0
    %361 = vmatpush1.xpose.msra.mxu0 0.0
    %362 = vmatprep.subr.mxu0 0.0
    %363 = vmatpush1.xpose.msra.mxu0 0.0
    %364 = vmatprep.subr.mxu0 0.0
    %365 = vmatpush1.xpose.msra.mxu0 0.0
    %366 = vmatprep.subr.mxu0 0.0
    %367 = vmatpush1.xpose.msra.mxu0 0.0
    %368 = vmatprep.subr.mxu0 0.0
    %369 = vmatpush1.xpose.msra.mxu0 0.0
    %370 = vmatprep.subr.mxu0 0.0
    %371 = vmatpush1.xpose.msra.mxu0 0.0
    %372 = vmatprep.subr.mxu0 0.0
    %373 = vmatpush1.xpose.msra.mxu0 0.0
    %374 = vmatprep.subr.mxu0 0.0
    %375 = vmatpush1.xpose.msra.mxu0 0.0
    %376 = vmatprep.subr.mxu0 0.0
    %377 = vmatpush1.xpose.msra.mxu0 0.0
    %378 = vmatprep.subr.mxu0 0.0
    %379 = vmatpush1.xpose.msra.mxu0 0.0
    %380 = vmatprep.subr.mxu0 0.0
    %381 = vmatpush1.xpose.msra.mxu0 0.0
    %382 = vmatprep.subr.mxu0 0.0
    %383 = vmatpush1.xpose.msra.mxu0 0.0
    %384 = vmatprep.subr.mxu0 0.0
    %385 = vmatpush1.xpose.msra.mxu0 0.0
    %386 = vmatprep.subr.mxu0 0.0
    %387 = vmatpush1.xpose.msra.mxu0 0.0
    %388 = vmatprep.subr.mxu0 0.0
    %389 = vmatpush1.xpose.msra.mxu0 %v356
    %390 = vmatprep.subr.mxu0 0.0
    %391 = vmatpush2.xpose.msra.mxu0 0.0
    %392 = vmatprep.subr.mxu0 0.0
    %393 = vmatpush2.xpose.msra.mxu0 0.0
    %394 = vmatprep.subr.mxu0 0.0
    %395 = vmatpush2.xpose.msra.mxu0 0.0
    %396 = vmatprep.subr.mxu0 0.0
    %397 = vmatpush2.xpose.msra.mxu0 0.0
    %398 = vmatprep.subr.mxu0 0.0
    %399 = vmatpush2.xpose.msra.mxu0 0.0
    %400 = vmatprep.subr.mxu0 0.0
    %401 = vmatpush2.xpose.msra.mxu0 0.0
    %402 = vmatprep.subr.mxu0 0.0
    %403 = vmatpush2.xpose.msra.mxu0 0.0
    %404 = vmatprep.subr.mxu0 0.0
    %405 = vmatpush2.xpose.msra.mxu0 0.0
    %406 = vmatprep.subr.mxu0 0.0
    %407 = vmatpush2.xpose.msra.mxu0 0.0
    %408 = vmatprep.subr.mxu0 0.0
    %409 = vmatpush2.xpose.msra.mxu0 0.0
    %410 = vmatprep.subr.mxu0 0.0
    %411 = vmatpush2.xpose.msra.mxu0 0.0
    %412 = vmatprep.subr.mxu0 0.0
    %413 = vmatpush2.xpose.msra.mxu0 0.0
    %414 = vmatprep.subr.mxu0 0.0
    %415 = vmatpush2.xpose.msra.mxu0 0.0
    %416 = vmatprep.subr.mxu0 0.0
    %417 = vmatpush2.xpose.msra.mxu0 0.0
    %418 = vmatprep.subr.mxu0 0.0
    %419 = vmatpush2.xpose.msra.mxu0 0.0
    %420 = vmatprep.subr.mxu0 0.0
    %421 = vmatpush2.xpose.msra.mxu0 0.0
    %422 = vmatprep.mubr.f32.mxu0 0.0
    %423 = vmatmul.mubr.f32.gmra.mxu0 %v332
    %v424 = vpop.f32.mrf.mxu0
    %v425 = vadd.f32 0.0, %v424
    %v426 = vpop.f32.mrf.mxu0
    %427 = vmatprep.mubr.f32.mxu0 0.0
    %428 = vmatmul.mubr.f32.gmra.mxu0 %v335
    %v429 = vpop.f32.mrf.mxu0
    %v430 = vadd.f32 0.0, %v429
    %v431 = vpop.f32.mrf.mxu0
    %432 = vmatprep.mubr.f32.mxu0 0.0
    %433 = vmatmul.mubr.f32.gmra.mxu0 %v338
    %v434 = vpop.f32.mrf.mxu0
    %v435 = vadd.f32 0.0, %v434
    %v436 = vpop.f32.mrf.mxu0
    %437 = vmatprep.mubr.f32.mxu0 0.0
    %438 = vmatmul.mubr.f32.gmra.mxu0 %v341
    %v439 = vpop.f32.mrf.mxu0
    %v440 = vadd.f32 0.0, %v439
    %v441 = vpop.f32.mrf.mxu0
    %442 = vmatprep.mubr.f32.mxu0 0.0
    %443 = vmatmul.mubr.f32.gmra.mxu0 %v344
    %v444 = vpop.f32.mrf.mxu0
    %v445 = vadd.f32 0.0, %v444
    %v446 = vpop.f32.mrf.mxu0
    %447 = vmatprep.mubr.f32.mxu0 0.0
    %448 = vmatmul.mubr.f32.gmra.mxu0 %v347
    %v449 = vpop.f32.mrf.mxu0
    %v450 = vadd.f32 0.0, %v449
    %v451 = vpop.f32.mrf.mxu0
    %452 = vmatprep.mubr.f32.mxu0 0.0
    %453 = vmatmul.mubr.f32.gmra.mxu0 %v350
    %v454 = vpop.f32.mrf.mxu0
    %v455 = vadd.f32 0.0, %v454
    %v456 = vpop.f32.mrf.mxu0
    %457 = vmatprep.mubr.f32.mxu0 0.0
    %458 = vmatmul.mubr.f32.gmra.mxu0 %v353
    %v459 = vpop.f32.mrf.mxu0
    %v460 = vadd.f32 0.0, %v459
    %v461 = vpop.f32.mrf.mxu0
    %462 = vdwg.mxu0
    %v464 = vsel %vm117, %v327, 0
    %v467 = vsel %vm117, %v328, 0
    %v470 = vsel %vm117, %v329, 0
    %v473 = vsel %vm117, %v330, 0
    %v476 = vsel %vm117, %v197, 0
    %v479 = vsel %vm117, %v202, 0
    %481 = vmatprep.subr.mxu0 0.0
    %482 = vmatpush1.xpose.msra.mxu0 0.0
    %483 = vmatprep.subr.mxu0 0.0
    %484 = vmatpush1.xpose.msra.mxu0 0.0
    %485 = vmatprep.subr.mxu0 0.0
    %486 = vmatpush1.xpose.msra.mxu0 0.0
    %487 = vmatprep.subr.mxu0 0.0
    %488 = vmatpush1.xpose.msra.mxu0 0.0
    %489 = vmatprep.subr.mxu0 0.0
    %490 = vmatpush1.xpose.msra.mxu0 0.0
    %491 = vmatprep.subr.mxu0 0.0
    %492 = vmatpush1.xpose.msra.mxu0 0.0
    %493 = vmatprep.subr.mxu0 0.0
    %494 = vmatpush1.xpose.msra.mxu0 0.0
    %495 = vmatprep.subr.mxu0 0.0
    %496 = vmatpush1.xpose.msra.mxu0 0.0
    %497 = vmatprep.subr.mxu0 0.0
    %498 = vmatpush1.xpose.msra.mxu0 0.0
    %499 = vmatprep.subr.mxu0 0.0
    %500 = vmatpush1.xpose.msra.mxu0 0.0
    %501 = vmatprep.subr.mxu0 0.0
    %502 = vmatpush1.xpose.msra.mxu0 0.0
    %503 = vmatprep.subr.mxu0 0.0
    %504 = vmatpush1.xpose.msra.mxu0 0.0
    %505 = vmatprep.subr.mxu0 0.0
    %506 = vmatpush1.xpose.msra.mxu0 0.0
    %507 = vmatprep.subr.mxu0 0.0
    %508 = vmatpush1.xpose.msra.mxu0 0.0
    %509 = vmatprep.subr.mxu0 0.0
    %510 = vmatpush1.xpose.msra.mxu0 %v479
    %511 = vmatprep.subr.mxu0 0.0
    %512 = vmatpush1.xpose.msra.mxu0 %v476
    %513 = vmatprep.subr.mxu0 0.0
    %514 = vmatpush2.xpose.msra.mxu0 0.0
    %515 = vmatprep.subr.mxu0 0.0
    %516 = vmatpush2.xpose.msra.mxu0 0.0
    %517 = vmatprep.subr.mxu0 0.0
    %518 = vmatpush2.xpose.msra.mxu0 0.0
    %519 = vmatprep.subr.mxu0 0.0
    %520 = vmatpush2.xpose.msra.mxu0 0.0
    %521 = vmatprep.subr.mxu0 0.0
    %522 = vmatpush2.xpose.msra.mxu0 0.0
    %523 = vmatprep.subr.mxu0 0.0
    %524 = vmatpush2.xpose.msra.mxu0 0.0
    %525 = vmatprep.subr.mxu0 0.0
    %526 = vmatpush2.xpose.msra.mxu0 0.0
    %527 = vmatprep.subr.mxu0 0.0
    %528 = vmatpush2.xpose.msra.mxu0 0.0
    %529 = vmatprep.subr.mxu0 0.0
    %530 = vmatpush2.xpose.msra.mxu0 0.0
    %531 = vmatprep.subr.mxu0 0.0
    %532 = vmatpush2.xpose.msra.mxu0 0.0
    %533 = vmatprep.subr.mxu0 0.0
    %534 = vmatpush2.xpose.msra.mxu0 0.0
    %535 = vmatprep.subr.mxu0 0.0
    %536 = vmatpush2.xpose.msra.mxu0 0.0
    %537 = vmatprep.subr.mxu0 0.0
    %538 = vmatpush2.xpose.msra.mxu0 0.0
    %539 = vmatprep.subr.mxu0 0.0
    %540 = vmatpush2.xpose.msra.mxu0 0.0
    %541 = vmatprep.subr.mxu0 0.0
    %542 = vmatpush2.xpose.msra.mxu0 0.0
    %543 = vmatprep.subr.mxu0 0.0
    %544 = vmatpush2.xpose.msra.mxu0 0.0
    %545 = vmatprep.mubr.f32.mxu0 0.0
    %546 = vmatmul.mubr.f32.gmra.mxu0 %v464
    %v547 = vpop.f32.mrf.mxu0
    %v548 = vadd.f32 0.0, %v547
    %v549 = vpop.f32.mrf.mxu0
    %550 = vmatprep.mubr.f32.mxu0 0.0
    %551 = vmatmul.mubr.f32.gmra.mxu0 %v467
    %v552 = vpop.f32.mrf.mxu0
    %v553 = vadd.f32 0.0, %v552
    %v554 = vpop.f32.mrf.mxu0
    %555 = vmatprep.mubr.f32.mxu0 0.0
    %556 = vmatmul.mubr.f32.gmra.mxu0 %v470
    %v557 = vpop.f32.mrf.mxu0
    %v558 = vadd.f32 0.0, %v557
    %v559 = vpop.f32.mrf.mxu0
    %560 = vmatprep.mubr.f32.mxu0 0.0
    %561 = vmatmul.mubr.f32.gmra.mxu0 %v473
    %v562 = vpop.f32.mrf.mxu0
    %v563 = vadd.f32 0.0, %v562
    %v564 = vpop.f32.mrf.mxu0
    %565 = vdwg.mxu0
    %v566 = vmax.f32 %v425, -50000.0
    %v567 = vmax.f32 %v430, -50000.0
    %v568 = vmax.f32 %v435, -50000.0
    %v569 = vmax.f32 %v440, -50000.0
    %v570 = vmax.f32 %v445, -50000.0
    %v571 = vmax.f32 %v450, -50000.0
    %v572 = vmax.f32 %v455, -50000.0
    %v573 = vmax.f32 %v460, -50000.0
    %v574 = vmax.f32 %v548, -50000.0
    %v575 = vmax.f32 %v553, -50000.0
    %v576 = vmax.f32 %v558, -50000.0
    %v577 = vmax.f32 %v563, -50000.0
    %v578 = vmin.f32 %v566, 50000.0
    %v579 = vmin.f32 %v567, 50000.0
    %v580 = vmin.f32 %v568, 50000.0
    %v581 = vmin.f32 %v569, 50000.0
    %v582 = vmin.f32 %v570, 50000.0
    %v583 = vmin.f32 %v571, 50000.0
    %v584 = vmin.f32 %v572, 50000.0
    %v585 = vmin.f32 %v573, 50000.0
    %v586 = vmin.f32 %v574, 50000.0
    %v587 = vmin.f32 %v575, 50000.0
    %v588 = vmin.f32 %v576, 50000.0
    %v589 = vmin.f32 %v577, 50000.0
    %vm590 = vcmask 130048
    %v591 = vsel %vm590, %v586, -inf
    %592 = vmax.xlane.f32.xlu0 %v591
    %v593 = vpop.xlane.xlu0 %592
    %v594 = vsel %vm590, %v587, -inf
    %595 = vmax.xlane.f32.xlu0 %v594
    %v596 = vpop.xlane.xlu0 %595
    %v597 = vsel %vm590, %v588, -inf
    %598 = vmax.xlane.f32.xlu0 %v597
    %v599 = vpop.xlane.xlu0 %598
    %v600 = vsel %vm590, %v589, -inf
    %601 = vmax.xlane.f32.xlu0 %v600
    %v602 = vpop.xlane.xlu0 %601
    %v603 = vsub.f32 %v586, %v593
    %v604 = vsub.f32 %v587, %v596
    %v605 = vsub.f32 %v588, %v599
    %v606 = vsub.f32 %v589, %v602
    %v607 = vmax.f32 %v603, -50000.0
    %v608 = vmax.f32 %v604, -50000.0
    %v609 = vmax.f32 %v605, -50000.0
    %v610 = vmax.f32 %v606, -50000.0
    %v611 = vmul.f32 %v607, 1.442695
    %v612 = vpow.pop %v611
    %v613 = vmul.f32 %v608, 1.442695
    %v614 = vpow.pop %v613
    %v615 = vmul.f32 %v609, 1.442695
    %v616 = vpow.pop %v615
    %v617 = vmul.f32 %v610, 1.442695
    %v618 = vpow.pop %v617
    %v619 = vsel %vm590, %v612, 0.0
    %620 = vadd.xlane.f32.xlu0 %v619
    %v621 = vpop.xlane.xlu0 %620
    %v622 = vsel %vm590, %v614, 0.0
    %623 = vadd.xlane.f32.xlu0 %v622
    %v624 = vpop.xlane.xlu0 %623
    %v625 = vsel %vm590, %v616, 0.0
    %626 = vadd.xlane.f32.xlu0 %v625
    %v627 = vpop.xlane.xlu0 %626
    %v628 = vsel %vm590, %v618, 0.0
    %629 = vadd.xlane.f32.xlu0 %v628
    %v630 = vpop.xlane.xlu0 %629
    %v631 = vrcp.pop %v621
    %v632 = vrcp.pop %v624
    %v633 = vrcp.pop %v627
    %v634 = vrcp.pop %v630
    %v635 = vmul.f32 %v612, %v631
    %v636 = vmul.f32 %v614, %v632
    %v637 = vmul.f32 %v616, %v633
    %v638 = vmul.f32 %v618, %v634
    %vm639 = vcmask 64512
    %v640 = vsel %vm639, %v578, -inf
    %641 = vmax.xlane.f32.xlu0 %v640
    %v642 = vpop.xlane.xlu0 %641
    %v643 = vsel %vm639, %v579, -inf
    %644 = vmax.xlane.f32.xlu0 %v643
    %v645 = vpop.xlane.xlu0 %644
    %v646 = vsel %vm639, %v580, -inf
    %647 = vmax.xlane.f32.xlu0 %v646
    %v648 = vpop.xlane.xlu0 %647
    %v649 = vsel %vm639, %v581, -inf
    %650 = vmax.xlane.f32.xlu0 %v649
    %v651 = vpop.xlane.xlu0 %650
    %v652 = vsel %vm639, %v582, -inf
    %653 = vmax.xlane.f32.xlu0 %v652
    %v654 = vpop.xlane.xlu0 %653
    %v655 = vsel %vm639, %v583, -inf
    %656 = vmax.xlane.f32.xlu0 %v655
    %v657 = vpop.xlane.xlu0 %656
    %v658 = vsel %vm639, %v584, -inf
    %659 = vmax.xlane.f32.xlu0 %v658
    %v660 = vpop.xlane.xlu0 %659
    %v661 = vsel %vm639, %v585, -inf
    %662 = vmax.xlane.f32.xlu0 %v661
    %v663 = vpop.xlane.xlu0 %662
    %v664 = vsub.f32 %v578, %v642
    %v665 = vsub.f32 %v579, %v645
    %v666 = vsub.f32 %v580, %v648
    %v667 = vsub.f32 %v581, %v651
    %v668 = vsub.f32 %v582, %v654
    %v669 = vsub.f32 %v583, %v657
    %v670 = vsub.f32 %v584, %v660
    %v671 = vsub.f32 %v585, %v663
    %v672 = vmul.f32 %v664, 1.442695
    %v673 = vpow.pop %v672
    %v674 = vmul.f32 %v665, 1.442695
    %v675 = vpow.pop %v674
    %v676 = vmul.f32 %v666, 1.442695
    %v677 = vpow.pop %v676
    %v678 = vmul.f32 %v667, 1.442695
    %v679 = vpow.pop %v678
    %v680 = vmul.f32 %v668, 1.442695
    %v681 = vpow.pop %v680
    %v682 = vmul.f32 %v669, 1.442695
    %v683 = vpow.pop %v682
    %v684 = vmul.f32 %v670, 1.442695
    %v685 = vpow.pop %v684
    %v686 = vmul.f32 %v671, 1.442695
    %v687 = vpow.pop %v686
    %v688 = vsel %vm639, %v673, 0.0
    %689 = vadd.xlane.f32.xlu0 %v688
    %v690 = vpop.xlane.xlu0 %689
    %v691 = vsel %vm639, %v675, 0.0
    %692 = vadd.xlane.f32.xlu0 %v691
    %v693 = vpop.xlane.xlu0 %692
    %v694 = vsel %vm639, %v677, 0.0
    %695 = vadd.xlane.f32.xlu0 %v694
    %v696 = vpop.xlane.xlu0 %695
    %v697 = vsel %vm639, %v679, 0.0
    %698 = vadd.xlane.f32.xlu0 %v697
    %v699 = vpop.xlane.xlu0 %698
    %v700 = vsel %vm639, %v681, 0.0
    %701 = vadd.xlane.f32.xlu0 %v700
    %v702 = vpop.xlane.xlu0 %701
    %v703 = vsel %vm639, %v683, 0.0
    %704 = vadd.xlane.f32.xlu0 %v703
    %v705 = vpop.xlane.xlu0 %704
    %v706 = vsel %vm639, %v685, 0.0
    %707 = vadd.xlane.f32.xlu0 %v706
    %v708 = vpop.xlane.xlu0 %707
    %v709 = vsel %vm639, %v687, 0.0
    %710 = vadd.xlane.f32.xlu0 %v709
    %v711 = vpop.xlane.xlu0 %710
    %v712 = vrcp.pop %v690
    %v713 = vrcp.pop %v693
    %v714 = vrcp.pop %v696
    %v715 = vrcp.pop %v699
    %v716 = vrcp.pop %v702
    %v717 = vrcp.pop %v705
    %v718 = vrcp.pop %v708
    %v719 = vrcp.pop %v711
    %v720 = vmul.f32 %v673, %v712
    %v721 = vmul.f32 %v675, %v713
    %v722 = vmul.f32 %v677, %v714
    %v723 = vmul.f32 %v679, %v715
    %v724 = vmul.f32 %v681, %v716
    %v725 = vmul.f32 %v683, %v717
    %v726 = vmul.f32 %v685, %v718
    %v727 = vmul.f32 %v687, %v719
    %728 = vrot.lane.b32.xlu0 %v299, 96
    %v729 = vpop.permute.xlu0 %728
    %v732 = vsel %vm639, %v720, 0
    %v735 = vsel %vm639, %v721, 0
    %v738 = vsel %vm639, %v722, 0
    %v741 = vsel %vm639, %v723, 0
    %v744 = vsel %vm639, %v724, 0
    %v747 = vsel %vm639, %v725, 0
    %v750 = vsel %vm639, %v726, 0
    %v753 = vsel %vm639, %v727, 0
    %755 = vmatprep.subr.mxu0 0.0
    %756 = vmatpush1.msra.mxu0 0.0
    %757 = vmatprep.subr.mxu0 0.0
    %758 = vmatpush1.msra.mxu0 0.0
    %759 = vmatprep.subr.mxu0 0.0
    %760 = vmatpush1.msra.mxu0 0.0
    %761 = vmatprep.subr.mxu0 0.0
    %762 = vmatpush1.msra.mxu0 0.0
    %763 = vmatprep.subr.mxu0 0.0
    %764 = vmatpush1.msra.mxu0 0.0
    %765 = vmatprep.subr.mxu0 0.0
    %766 = vmatpush1.msra.mxu0 0.0
    %767 = vmatprep.subr.mxu0 0.0
    %768 = vmatpush1.msra.mxu0 0.0
    %769 = vmatprep.subr.mxu0 0.0
    %770 = vmatpush1.msra.mxu0 0.0
    %771 = vmatprep.subr.mxu0 0.0
    %772 = vmatpush1.msra.mxu0 0.0
    %773 = vmatprep.subr.mxu0 0.0
    %774 = vmatpush1.msra.mxu0 0.0
    %775 = vmatprep.subr.mxu0 0.0
    %776 = vmatpush1.msra.mxu0 0.0
    %777 = vmatprep.subr.mxu0 0.0
    %778 = vmatpush1.msra.mxu0 0.0
    %779 = vmatprep.subr.mxu0 0.0
    %780 = vmatpush1.msra.mxu0 0.0
    %781 = vmatprep.subr.mxu0 0.0
    %782 = vmatpush1.msra.mxu0 0.0
    %783 = vmatprep.subr.mxu0 0.0
    %784 = vmatpush1.msra.mxu0 0.0
    %785 = vmatprep.subr.mxu0 0.0
    %786 = vmatpush1.msra.mxu0 %v729
    %787 = vmatprep.subr.mxu0 0.0
    %788 = vmatpush2.msra.mxu0 0.0
    %789 = vmatprep.subr.mxu0 0.0
    %790 = vmatpush2.msra.mxu0 0.0
    %791 = vmatprep.subr.mxu0 0.0
    %792 = vmatpush2.msra.mxu0 0.0
    %793 = vmatprep.subr.mxu0 0.0
    %794 = vmatpush2.msra.mxu0 0.0
    %795 = vmatprep.subr.mxu0 0.0
    %796 = vmatpush2.msra.mxu0 0.0
    %797 = vmatprep.subr.mxu0 0.0
    %798 = vmatpush2.msra.mxu0 0.0
    %799 = vmatprep.subr.mxu0 0.0
    %800 = vmatpush2.msra.mxu0 0.0
    %801 = vmatprep.subr.mxu0 0.0
    %802 = vmatpush2.msra.mxu0 0.0
    %803 = vmatprep.subr.mxu0 0.0
    %804 = vmatpush2.msra.mxu0 0.0
    %805 = vmatprep.subr.mxu0 0.0
    %806 = vmatpush2.msra.mxu0 0.0
    %807 = vmatprep.subr.mxu0 0.0
    %808 = vmatpush2.msra.mxu0 0.0
    %809 = vmatprep.subr.mxu0 0.0
    %810 = vmatpush2.msra.mxu0 0.0
    %811 = vmatprep.subr.mxu0 0.0
    %812 = vmatpush2.msra.mxu0 0.0
    %813 = vmatprep.subr.mxu0 0.0
    %814 = vmatpush2.msra.mxu0 0.0
    %815 = vmatprep.subr.mxu0 0.0
    %816 = vmatpush2.msra.mxu0 0.0
    %817 = vmatprep.subr.mxu0 0.0
    %818 = vmatpush2.msra.mxu0 0.0
    %819 = vmatprep.mubr.f32.mxu0 0.0
    %820 = vmatmul.mubr.f32.gmra.mxu0 %v732
    %v821 = vpop.f32.mrf.mxu0
    %v822 = vadd.f32 0.0, %v821
    %v823 = vpop.f32.mrf.mxu0
    %824 = vmatprep.mubr.f32.mxu0 0.0
    %825 = vmatmul.mubr.f32.gmra.mxu0 %v735
    %v826 = vpop.f32.mrf.mxu0
    %v827 = vadd.f32 0.0, %v826
    %v828 = vpop.f32.mrf.mxu0
    %829 = vmatprep.mubr.f32.mxu0 0.0
    %830 = vmatmul.mubr.f32.gmra.mxu0 %v738
    %v831 = vpop.f32.mrf.mxu0
    %v832 = vadd.f32 0.0, %v831
    %v833 = vpop.f32.mrf.mxu0
    %834 = vmatprep.mubr.f32.mxu0 0.0
    %835 = vmatmul.mubr.f32.gmra.mxu0 %v741
    %v836 = vpop.f32.mrf.mxu0
    %v837 = vadd.f32 0.0, %v836
    %v838 = vpop.f32.mrf.mxu0
    %839 = vmatprep.mubr.f32.mxu0 0.0
    %840 = vmatmul.mubr.f32.gmra.mxu0 %v744
    %v841 = vpop.f32.mrf.mxu0
    %v842 = vadd.f32 0.0, %v841
    %v843 = vpop.f32.mrf.mxu0
    %844 = vmatprep.mubr.f32.mxu0 0.0
    %845 = vmatmul.mubr.f32.gmra.mxu0 %v747
    %v846 = vpop.f32.mrf.mxu0
    %v847 = vadd.f32 0.0, %v846
    %v848 = vpop.f32.mrf.mxu0
    %849 = vmatprep.mubr.f32.mxu0 0.0
    %850 = vmatmul.mubr.f32.gmra.mxu0 %v750
    %v851 = vpop.f32.mrf.mxu0
    %v852 = vadd.f32 0.0, %v851
    %v853 = vpop.f32.mrf.mxu0
    %854 = vmatprep.mubr.f32.mxu0 0.0
    %855 = vmatmul.mubr.f32.gmra.mxu0 %v753
    %v856 = vpop.f32.mrf.mxu0
    %v857 = vadd.f32 0.0, %v856
    %v858 = vpop.f32.mrf.mxu0
    %859 = vdwg.mxu0
    %v860 = vmul.f32 %v822, %v307
    %v861 = vmul.f32 %v827, %v308
    %v862 = vmul.f32 %v832, %v309
    %v863 = vmul.f32 %v837, %v310
    %v864 = vmul.f32 %v842, %v311
    %v865 = vmul.f32 %v847, %v312
    %v866 = vmul.f32 %v852, %v313
    %v867 = vmul.f32 %v857, %v314
    %868 = vrot.lane.b32.xlu0 %v197, 96
    %v869 = vpop.permute.xlu0 %868
    %870 = vrot.lane.b32.xlu0 %v202, 96
    %v871 = vpop.permute.xlu0 %870
    %v875 = vsel %vm590, %v635, 0
    %v878 = vsel %vm590, %v636, 0
    %v881 = vsel %vm590, %v637, 0
    %v884 = vsel %vm590, %v638, 0
    %886 = vmatprep.subr.mxu0 0.0
    %887 = vmatpush1.msra.mxu0 0.0
    %888 = vmatprep.subr.mxu0 0.0
    %889 = vmatpush1.msra.mxu0 0.0
    %890 = vmatprep.subr.mxu0 0.0
    %891 = vmatpush1.msra.mxu0 0.0
    %892 = vmatprep.subr.mxu0 0.0
    %893 = vmatpush1.msra.mxu0 0.0
    %894 = vmatprep.subr.mxu0 0.0
    %895 = vmatpush1.msra.mxu0 0.0
    %896 = vmatprep.subr.mxu0 0.0
    %897 = vmatpush1.msra.mxu0 0.0
    %898 = vmatprep.subr.mxu0 0.0
    %899 = vmatpush1.msra.mxu0 0.0
    %900 = vmatprep.subr.mxu0 0.0
    %901 = vmatpush1.msra.mxu0 0.0
    %902 = vmatprep.subr.mxu0 0.0
    %903 = vmatpush1.msra.mxu0 0.0
    %904 = vmatprep.subr.mxu0 0.0
    %905 = vmatpush1.msra.mxu0 0.0
    %906 = vmatprep.subr.mxu0 0.0
    %907 = vmatpush1.msra.mxu0 0.0
    %908 = vmatprep.subr.mxu0 0.0
    %909 = vmatpush1.msra.mxu0 0.0
    %910 = vmatprep.subr.mxu0 0.0
    %911 = vmatpush1.msra.mxu0 0.0
    %912 = vmatprep.subr.mxu0 0.0
    %913 = vmatpush1.msra.mxu0 0.0
    %914 = vmatprep.subr.mxu0 0.0
    %915 = vmatpush1.msra.mxu0 %v871
    %916 = vmatprep.subr.mxu0 0.0
    %917 = vmatpush1.msra.mxu0 %v869
    %918 = vmatprep.subr.mxu0 0.0
    %919 = vmatpush2.msra.mxu0 0.0
    %920 = vmatprep.subr.mxu0 0.0
    %921 = vmatpush2.msra.mxu0 0.0
    %922 = vmatprep.subr.mxu0 0.0
    %923 = vmatpush2.msra.mxu0 0.0
    %924 = vmatprep.subr.mxu0 0.0
    %925 = vmatpush2.msra.mxu0 0.0
    %926 = vmatprep.subr.mxu0 0.0
    %927 = vmatpush2.msra.mxu0 0.0
    %928 = vmatprep.subr.mxu0 0.0
    %929 = vmatpush2.msra.mxu0 0.0
    %930 = vmatprep.subr.mxu0 0.0
    %931 = vmatpush2.msra.mxu0 0.0
    %932 = vmatprep.subr.mxu0 0.0
    %933 = vmatpush2.msra.mxu0 0.0
    %934 = vmatprep.subr.mxu0 0.0
    %935 = vmatpush2.msra.mxu0 0.0
    %936 = vmatprep.subr.mxu0 0.0
    %937 = vmatpush2.msra.mxu0 0.0
    %938 = vmatprep.subr.mxu0 0.0
    %939 = vmatpush2.msra.mxu0 0.0
    %940 = vmatprep.subr.mxu0 0.0
    %941 = vmatpush2.msra.mxu0 0.0
    %942 = vmatprep.subr.mxu0 0.0
    %943 = vmatpush2.msra.mxu0 0.0
    %944 = vmatprep.subr.mxu0 0.0
    %945 = vmatpush2.msra.mxu0 0.0
    %946 = vmatprep.subr.mxu0 0.0
    %947 = vmatpush2.msra.mxu0 0.0
    %948 = vmatprep.subr.mxu0 0.0
    %949 = vmatpush2.msra.mxu0 0.0
    %950 = vmatprep.mubr.f32.mxu0 0.0
    %951 = vmatmul.mubr.f32.gmra.mxu0 %v875
    %v952 = vpop.f32.mrf.mxu0
    %v953 = vadd.f32 0.0, %v952
    %v954 = vpop.f32.mrf.mxu0
    %955 = vmatprep.mubr.f32.mxu0 0.0
    %956 = vmatmul.mubr.f32.gmra.mxu0 %v878
    %v957 = vpop.f32.mrf.mxu0
    %v958 = vadd.f32 0.0, %v957
    %v959 = vpop.f32.mrf.mxu0
    %960 = vmatprep.mubr.f32.mxu0 0.0
    %961 = vmatmul.mubr.f32.gmra.mxu0 %v881
    %v962 = vpop.f32.mrf.mxu0
    %v963 = vadd.f32 0.0, %v962
    %v964 = vpop.f32.mrf.mxu0
    %965 = vmatprep.mubr.f32.mxu0 0.0
    %966 = vmatmul.mubr.f32.gmra.mxu0 %v884
    %v967 = vpop.f32.mrf.mxu0
    %v968 = vadd.f32 0.0, %v967
    %v969 = vpop.f32.mrf.mxu0
    %970 = vdwg.mxu0
    %v971 = vmul.f32 %v953, %v315
    %v972 = vmul.f32 %v958, %v316
    %v973 = vmul.f32 %v963, %v317
    %v974 = vmul.f32 %v968, %v318
    %v975 = vadd.f32 %v860, %v862
    %v976 = vadd.f32 %v861, %v863
    %v977 = vadd.f32 %v971, %v972
    %v978 = vadd.f32 %v975, %v864
    %v979 = vadd.f32 %v976, %v865
    %v980 = vadd.f32 %v977, %v973
    %v981 = vadd.f32 %v978, %v866
    %v982 = vadd.f32 %v979, %v867
    %v983 = vadd.f32 %v980, %v974
    %v984 = vmul.f32 %v207, %v307
    %v985 = vmul.f32 %v212, %v308
    %v986 = vmul.f32 %v207, %v309
    %v987 = vmul.f32 %v212, %v310
    %v988 = vmul.f32 %v207, %v311
    %v989 = vmul.f32 %v212, %v312
    %v990 = vmul.f32 %v207, %v313
    %v991 = vmul.f32 %v212, %v314
    %v992 = vmul.f32 %v304, %v315
    %v993 = vmul.f32 %v304, %v316
    %v994 = vmul.f32 %v304, %v317
    %v995 = vmul.f32 %v304, %v318
    %v997 = vsel %vm117, %v984, 0
    %v1000 = vsel %vm117, %v985, 0
    %v1003 = vsel %vm117, %v986, 0
    %v1006 = vsel %vm117, %v987, 0
    %v1009 = vsel %vm117, %v988, 0
    %v1012 = vsel %vm117, %v989, 0
    %v1015 = vsel %vm117, %v990, 0
    %v1018 = vsel %vm117, %v991, 0
    %v1021 = vsel %vm117, %v304, 0
    %1023 = vmatprep.subr.mxu0 0.0
    %1024 = vmatpush1.xpose.msra.mxu0 0.0
    %1025 = vmatprep.subr.mxu0 0.0
    %1026 = vmatpush1.xpose.msra.mxu0 0.0
    %1027 = vmatprep.subr.mxu0 0.0
    %1028 = vmatpush1.xpose.msra.mxu0 0.0
    %1029 = vmatprep.subr.mxu0 0.0
    %1030 = vmatpush1.xpose.msra.mxu0 0.0
    %1031 = vmatprep.subr.mxu0 0.0
    %1032 = vmatpush1.xpose.msra.mxu0 0.0
    %1033 = vmatprep.subr.mxu0 0.0
    %1034 = vmatpush1.xpose.msra.mxu0 0.0
    %1035 = vmatprep.subr.mxu0 0.0
    %1036 = vmatpush1.xpose.msra.mxu0 0.0
    %1037 = vmatprep.subr.mxu0 0.0
    %1038 = vmatpush1.xpose.msra.mxu0 0.0
    %1039 = vmatprep.subr.mxu0 0.0
    %1040 = vmatpush1.xpose.msra.mxu0 0.0
    %1041 = vmatprep.subr.mxu0 0.0
    %1042 = vmatpush1.xpose.msra.mxu0 0.0
    %1043 = vmatprep.subr.mxu0 0.0
    %1044 = vmatpush1.xpose.msra.mxu0 0.0
    %1045 = vmatprep.subr.mxu0 0.0
    %1046 = vmatpush1.xpose.msra.mxu0 0.0
    %1047 = vmatprep.subr.mxu0 0.0
    %1048 = vmatpush1.xpose.msra.mxu0 0.0
    %1049 = vmatprep.subr.mxu0 0.0
    %1050 = vmatpush1.xpose.msra.mxu0 0.0
    %1051 = vmatprep.subr.mxu0 0.0
    %1052 = vmatpush1.xpose.msra.mxu0 0.0
    %1053 = vmatprep.subr.mxu0 0.0
    %1054 = vmatpush1.xpose.msra.mxu0 %v1021
    %1055 = vmatprep.subr.mxu0 0.0
    %1056 = vmatpush2.xpose.msra.mxu0 0.0
    %1057 = vmatprep.subr.mxu0 0.0
    %1058 = vmatpush2.xpose.msra.mxu0 0.0
    %1059 = vmatprep.subr.mxu0 0.0
    %1060 = vmatpush2.xpose.msra.mxu0 0.0
    %1061 = vmatprep.subr.mxu0 0.0
    %1062 = vmatpush2.xpose.msra.mxu0 0.0
    %1063 = vmatprep.subr.mxu0 0.0
    %1064 = vmatpush2.xpose.msra.mxu0 0.0
    %1065 = vmatprep.subr.mxu0 0.0
    %1066 = vmatpush2.xpose.msra.mxu0 0.0
    %1067 = vmatprep.subr.mxu0 0.0
    %1068 = vmatpush2.xpose.msra.mxu0 0.0
    %1069 = vmatprep.subr.mxu0 0.0
    %1070 = vmatpush2.xpose.msra.mxu0 0.0
    %1071 = vmatprep.subr.mxu0 0.0
    %1072 = vmatpush2.xpose.msra.mxu0 0.0
    %1073 = vmatprep.subr.mxu0 0.0
    %1074 = vmatpush2.xpose.msra.mxu0 0.0
    %1075 = vmatprep.subr.mxu0 0.0
    %1076 = vmatpush2.xpose.msra.mxu0 0.0
    %1077 = vmatprep.subr.mxu0 0.0
    %1078 = vmatpush2.xpose.msra.mxu0 0.0
    %1079 = vmatprep.subr.mxu0 0.0
    %1080 = vmatpush2.xpose.msra.mxu0 0.0
    %1081 = vmatprep.subr.mxu0 0.0
    %1082 = vmatpush2.xpose.msra.mxu0 0.0
    %1083 = vmatprep.subr.mxu0 0.0
    %1084 = vmatpush2.xpose.msra.mxu0 0.0
    %1085 = vmatprep.subr.mxu0 0.0
    %1086 = vmatpush2.xpose.msra.mxu0 0.0
    %1087 = vmatprep.mubr.f32.mxu0 0.0
    %1088 = vmatmul.mubr.f32.gmra.mxu0 %v997
    %v1089 = vpop.f32.mrf.mxu0
    %v1090 = vadd.f32 0.0, %v1089
    %v1091 = vpop.f32.mrf.mxu0
    %1092 = vmatprep.mubr.f32.mxu0 0.0
    %1093 = vmatmul.mubr.f32.gmra.mxu0 %v1000
    %v1094 = vpop.f32.mrf.mxu0
    %v1095 = vadd.f32 0.0, %v1094
    %v1096 = vpop.f32.mrf.mxu0
    %1097 = vmatprep.mubr.f32.mxu0 0.0
    %1098 = vmatmul.mubr.f32.gmra.mxu0 %v1003
    %v1099 = vpop.f32.mrf.mxu0
    %v1100 = vadd.f32 0.0, %v1099
    %v1101 = vpop.f32.mrf.mxu0
    %1102 = vmatprep.mubr.f32.mxu0 0.0
    %1103 = vmatmul.mubr.f32.gmra.mxu0 %v1006
    %v1104 = vpop.f32.mrf.mxu0
    %v1105 = vadd.f32 0.0, %v1104
    %v1106 = vpop.f32.mrf.mxu0
    %1107 = vmatprep.mubr.f32.mxu0 0.0
    %1108 = vmatmul.mubr.f32.gmra.mxu0 %v1009
    %v1109 = vpop.f32.mrf.mxu0
    %v1110 = vadd.f32 0.0, %v1109
    %v1111 = vpop.f32.mrf.mxu0
    %1112 = vmatprep.mubr.f32.mxu0 0.0
    %1113 = vmatmul.mubr.f32.gmra.mxu0 %v1012
    %v1114 = vpop.f32.mrf.mxu0
    %v1115 = vadd.f32 0.0, %v1114
    %v1116 = vpop.f32.mrf.mxu0
    %1117 = vmatprep.mubr.f32.mxu0 0.0
    %1118 = vmatmul.mubr.f32.gmra.mxu0 %v1015
    %v1119 = vpop.f32.mrf.mxu0
    %v1120 = vadd.f32 0.0, %v1119
    %v1121 = vpop.f32.mrf.mxu0
    %1122 = vmatprep.mubr.f32.mxu0 0.0
    %1123 = vmatmul.mubr.f32.gmra.mxu0 %v1018
    %v1124 = vpop.f32.mrf.mxu0
    %v1125 = vadd.f32 0.0, %v1124
    %v1126 = vpop.f32.mrf.mxu0
    %1127 = vdwg.mxu0
    %v1129 = vsel %vm117, %v992, 0
    %v1132 = vsel %vm117, %v993, 0
    %v1135 = vsel %vm117, %v994, 0
    %v1138 = vsel %vm117, %v995, 0
    %v1141 = vsel %vm117, %v207, 0
    %v1144 = vsel %vm117, %v212, 0
    %1146 = vmatprep.subr.mxu0 0.0
    %1147 = vmatpush1.xpose.msra.mxu0 0.0
    %1148 = vmatprep.subr.mxu0 0.0
    %1149 = vmatpush1.xpose.msra.mxu0 0.0
    %1150 = vmatprep.subr.mxu0 0.0
    %1151 = vmatpush1.xpose.msra.mxu0 0.0
    %1152 = vmatprep.subr.mxu0 0.0
    %1153 = vmatpush1.xpose.msra.mxu0 0.0
    %1154 = vmatprep.subr.mxu0 0.0
    %1155 = vmatpush1.xpose.msra.mxu0 0.0
    %1156 = vmatprep.subr.mxu0 0.0
    %1157 = vmatpush1.xpose.msra.mxu0 0.0
    %1158 = vmatprep.subr.mxu0 0.0
    %1159 = vmatpush1.xpose.msra.mxu0 0.0
    %1160 = vmatprep.subr.mxu0 0.0
    %1161 = vmatpush1.xpose.msra.mxu0 0.0
    %1162 = vmatprep.subr.mxu0 0.0
    %1163 = vmatpush1.xpose.msra.mxu0 0.0
    %1164 = vmatprep.subr.mxu0 0.0
    %1165 = vmatpush1.xpose.msra.mxu0 0.0
    %1166 = vmatprep.subr.mxu0 0.0
    %1167 = vmatpush1.xpose.msra.mxu0 0.0
    %1168 = vmatprep.subr.mxu0 0.0
    %1169 = vmatpush1.xpose.msra.mxu0 0.0
    %1170 = vmatprep.subr.mxu0 0.0
    %1171 = vmatpush1.xpose.msra.mxu0 0.0
    %1172 = vmatprep.subr.mxu0 0.0
    %1173 = vmatpush1.xpose.msra.mxu0 0.0
    %1174 = vmatprep.subr.mxu0 0.0
    %1175 = vmatpush1.xpose.msra.mxu0 %v1144
    %1176 = vmatprep.subr.mxu0 0.0
    %1177 = vmatpush1.xpose.msra.mxu0 %v1141
    %1178 = vmatprep.subr.mxu0 0.0
    %1179 = vmatpush2.xpose.msra.mxu0 0.0
    %1180 = vmatprep.subr.mxu0 0.0
    %1181 = vmatpush2.xpose.msra.mxu0 0.0
    %1182 = vmatprep.subr.mxu0 0.0
    %1183 = vmatpush2.xpose.msra.mxu0 0.0
    %1184 = vmatprep.subr.mxu0 0.0
    %1185 = vmatpush2.xpose.msra.mxu0 0.0
    %1186 = vmatprep.subr.mxu0 0.0
    %1187 = vmatpush2.xpose.msra.mxu0 0.0
    %1188 = vmatprep.subr.mxu0 0.0
    %1189 = vmatpush2.xpose.msra.mxu0 0.0
    %1190 = vmatprep.subr.mxu0 0.0
    %1191 = vmatpush2.xpose.msra.mxu0 0.0
    %1192 = vmatprep.subr.mxu0 0.0
    %1193 = vmatpush2.xpose.msra.mxu0 0.0
    %1194 = vmatprep.subr.mxu0 0.0
    %1195 = vmatpush2.xpose.msra.mxu0 0.0
    %1196 = vmatprep.subr.mxu0 0.0
    %1197 = vmatpush2.xpose.msra.mxu0 0.0
    %1198 = vmatprep.subr.mxu0 0.0
    %1199 = vmatpush2.xpose.msra.mxu0 0.0
    %1200 = vmatprep.subr.mxu0 0.0
    %1201 = vmatpush2.xpose.msra.mxu0 0.0
    %1202 = vmatprep.subr.mxu0 0.0
    %1203 = vmatpush2.xpose.msra.mxu0 0.0
    %1204 = vmatprep.subr.mxu0 0.0
    %1205 = vmatpush2.xpose.msra.mxu0 0.0
    %1206 = vmatprep.subr.mxu0 0.0
    %1207 = vmatpush2.xpose.msra.mxu0 0.0
    %1208 = vmatprep.subr.mxu0 0.0
    %1209 = vmatpush2.xpose.msra.mxu0 0.0
    %1210 = vmatprep.mubr.f32.mxu0 0.0
    %1211 = vmatmul.mubr.f32.gmra.mxu0 %v1129
    %v1212 = vpop.f32.mrf.mxu0
    %v1213 = vadd.f32 0.0, %v1212
    %v1214 = vpop.f32.mrf.mxu0
    %1215 = vmatprep.mubr.f32.mxu0 0.0
    %1216 = vmatmul.mubr.f32.gmra.mxu0 %v1132
    %v1217 = vpop.f32.mrf.mxu0
    %v1218 = vadd.f32 0.0, %v1217
    %v1219 = vpop.f32.mrf.mxu0
    %1220 = vmatprep.mubr.f32.mxu0 0.0
    %1221 = vmatmul.mubr.f32.gmra.mxu0 %v1135
    %v1222 = vpop.f32.mrf.mxu0
    %v1223 = vadd.f32 0.0, %v1222
    %v1224 = vpop.f32.mrf.mxu0
    %1225 = vmatprep.mubr.f32.mxu0 0.0
    %1226 = vmatmul.mubr.f32.gmra.mxu0 %v1138
    %v1227 = vpop.f32.mrf.mxu0
    %v1228 = vadd.f32 0.0, %v1227
    %v1229 = vpop.f32.mrf.mxu0
    %1230 = vdwg.mxu0
    %v1231 = vmax.f32 %v1090, -50000.0
    %v1232 = vmax.f32 %v1095, -50000.0
    %v1233 = vmax.f32 %v1100, -50000.0
    %v1234 = vmax.f32 %v1105, -50000.0
    %v1235 = vmax.f32 %v1110, -50000.0
    %v1236 = vmax.f32 %v1115, -50000.0
    %v1237 = vmax.f32 %v1120, -50000.0
    %v1238 = vmax.f32 %v1125, -50000.0
    %v1239 = vmax.f32 %v1213, -50000.0
    %v1240 = vmax.f32 %v1218, -50000.0
    %v1241 = vmax.f32 %v1223, -50000.0
    %v1242 = vmax.f32 %v1228, -50000.0
    %v1243 = vmin.f32 %v1231, 50000.0
    %v1244 = vmin.f32 %v1232, 50000.0
    %v1245 = vmin.f32 %v1233, 50000.0
    %v1246 = vmin.f32 %v1234, 50000.0
    %v1247 = vmin.f32 %v1235, 50000.0
    %v1248 = vmin.f32 %v1236, 50000.0
    %v1249 = vmin.f32 %v1237, 50000.0
    %v1250 = vmin.f32 %v1238, 50000.0
    %v1251 = vmin.f32 %v1239, 50000.0
    %v1252 = vmin.f32 %v1240, 50000.0
    %v1253 = vmin.f32 %v1241, 50000.0
    %v1254 = vmin.f32 %v1242, 50000.0
    %v1255 = vsel %vm590, %v1251, -inf
    %1256 = vmax.xlane.f32.xlu0 %v1255
    %v1257 = vpop.xlane.xlu0 %1256
    %v1258 = vsel %vm590, %v1252, -inf
    %1259 = vmax.xlane.f32.xlu0 %v1258
    %v1260 = vpop.xlane.xlu0 %1259
    %v1261 = vsel %vm590, %v1253, -inf
    %1262 = vmax.xlane.f32.xlu0 %v1261
    %v1263 = vpop.xlane.xlu0 %1262
    %v1264 = vsel %vm590, %v1254, -inf
    %1265 = vmax.xlane.f32.xlu0 %v1264
    %v1266 = vpop.xlane.xlu0 %1265
    %v1267 = vsub.f32 %v1251, %v1257
    %v1268 = vsub.f32 %v1252, %v1260
    %v1269 = vsub.f32 %v1253, %v1263
    %v1270 = vsub.f32 %v1254, %v1266
    %v1271 = vmax.f32 %v1267, -50000.0
    %v1272 = vmax.f32 %v1268, -50000.0
    %v1273 = vmax.f32 %v1269, -50000.0
    %v1274 = vmax.f32 %v1270, -50000.0
    %v1275 = vmul.f32 %v1271, 1.442695
    %v1276 = vpow.pop %v1275
    %v1277 = vmul.f32 %v1272, 1.442695
    %v1278 = vpow.pop %v1277
    %v1279 = vmul.f32 %v1273, 1.442695
    %v1280 = vpow.pop %v1279
    %v1281 = vmul.f32 %v1274, 1.442695
    %v1282 = vpow.pop %v1281
    %v1283 = vsel %vm590, %v1276, 0.0
    %1284 = vadd.xlane.f32.xlu0 %v1283
    %v1285 = vpop.xlane.xlu0 %1284
    %v1286 = vsel %vm590, %v1278, 0.0
    %1287 = vadd.xlane.f32.xlu0 %v1286
    %v1288 = vpop.xlane.xlu0 %1287
    %v1289 = vsel %vm590, %v1280, 0.0
    %1290 = vadd.xlane.f32.xlu0 %v1289
    %v1291 = vpop.xlane.xlu0 %1290
    %v1292 = vsel %vm590, %v1282, 0.0
    %1293 = vadd.xlane.f32.xlu0 %v1292
    %v1294 = vpop.xlane.xlu0 %1293
    %v1295 = vrcp.pop %v1285
    %v1296 = vrcp.pop %v1288
    %v1297 = vrcp.pop %v1291
    %v1298 = vrcp.pop %v1294
    %v1299 = vmul.f32 %v1276, %v1295
    %v1300 = vmul.f32 %v1278, %v1296
    %v1301 = vmul.f32 %v1280, %v1297
    %v1302 = vmul.f32 %v1282, %v1298
    %v1303 = vsel %vm639, %v1243, -inf
    %1304 = vmax.xlane.f32.xlu0 %v1303
    %v1305 = vpop.xlane.xlu0 %1304
    %v1306 = vsel %vm639, %v1244, -inf
    %1307 = vmax.xlane.f32.xlu0 %v1306
    %v1308 = vpop.xlane.xlu0 %1307
    %v1309 = vsel %vm639, %v1245, -inf
    %1310 = vmax.xlane.f32.xlu0 %v1309
    %v1311 = vpop.xlane.xlu0 %1310
    %v1312 = vsel %vm639, %v1246, -inf
    %1313 = vmax.xlane.f32.xlu0 %v1312
    %v1314 = vpop.xlane.xlu0 %1313
    %v1315 = vsel %vm639, %v1247, -inf
    %1316 = vmax.xlane.f32.xlu0 %v1315
    %v1317 = vpop.xlane.xlu0 %1316
    %v1318 = vsel %vm639, %v1248, -inf
    %1319 = vmax.xlane.f32.xlu0 %v1318
    %v1320 = vpop.xlane.xlu0 %1319
    %v1321 = vsel %vm639, %v1249, -inf
    %1322 = vmax.xlane.f32.xlu0 %v1321
    %v1323 = vpop.xlane.xlu0 %1322
    %v1324 = vsel %vm639, %v1250, -inf
    %1325 = vmax.xlane.f32.xlu0 %v1324
    %v1326 = vpop.xlane.xlu0 %1325
    %v1327 = vsub.f32 %v1243, %v1305
    %v1328 = vsub.f32 %v1244, %v1308
    %v1329 = vsub.f32 %v1245, %v1311
    %v1330 = vsub.f32 %v1246, %v1314
    %v1331 = vsub.f32 %v1247, %v1317
    %v1332 = vsub.f32 %v1248, %v1320
    %v1333 = vsub.f32 %v1249, %v1323
    %v1334 = vsub.f32 %v1250, %v1326
    %v1335 = vmul.f32 %v1327, 1.442695
    %v1336 = vpow.pop %v1335
    %v1337 = vmul.f32 %v1328, 1.442695
    %v1338 = vpow.pop %v1337
    %v1339 = vmul.f32 %v1329, 1.442695
    %v1340 = vpow.pop %v1339
    %v1341 = vmul.f32 %v1330, 1.442695
    %v1342 = vpow.pop %v1341
    %v1343 = vmul.f32 %v1331, 1.442695
    %v1344 = vpow.pop %v1343
    %v1345 = vmul.f32 %v1332, 1.442695
    %v1346 = vpow.pop %v1345
    %v1347 = vmul.f32 %v1333, 1.442695
    %v1348 = vpow.pop %v1347
    %v1349 = vmul.f32 %v1334, 1.442695
    %v1350 = vpow.pop %v1349
    %v1351 = vsel %vm639, %v1336, 0.0
    %1352 = vadd.xlane.f32.xlu0 %v1351
    %v1353 = vpop.xlane.xlu0 %1352
    %v1354 = vsel %vm639, %v1338, 0.0
    %1355 = vadd.xlane.f32.xlu0 %v1354
    %v1356 = vpop.xlane.xlu0 %1355
    %v1357 = vsel %vm639, %v1340, 0.0
    %1358 = vadd.xlane.f32.xlu0 %v1357
    %v1359 = vpop.xlane.xlu0 %1358
    %v1360 = vsel %vm639, %v1342, 0.0
    %1361 = vadd.xlane.f32.xlu0 %v1360
    %v1362 = vpop.xlane.xlu0 %1361
    %v1363 = vsel %vm639, %v1344, 0.0
    %1364 = vadd.xlane.f32.xlu0 %v1363
    %v1365 = vpop.xlane.xlu0 %1364
    %v1366 = vsel %vm639, %v1346, 0.0
    %1367 = vadd.xlane.f32.xlu0 %v1366
    %v1368 = vpop.xlane.xlu0 %1367
    %v1369 = vsel %vm639, %v1348, 0.0
    %1370 = vadd.xlane.f32.xlu0 %v1369
    %v1371 = vpop.xlane.xlu0 %1370
    %v1372 = vsel %vm639, %v1350, 0.0
    %1373 = vadd.xlane.f32.xlu0 %v1372
    %v1374 = vpop.xlane.xlu0 %1373
    %v1375 = vrcp.pop %v1353
    %v1376 = vrcp.pop %v1356
    %v1377 = vrcp.pop %v1359
    %v1378 = vrcp.pop %v1362
    %v1379 = vrcp.pop %v1365
    %v1380 = vrcp.pop %v1368
    %v1381 = vrcp.pop %v1371
    %v1382 = vrcp.pop %v1374
    %v1383 = vmul.f32 %v1336, %v1375
    %v1384 = vmul.f32 %v1338, %v1376
    %v1385 = vmul.f32 %v1340, %v1377
    %v1386 = vmul.f32 %v1342, %v1378
    %v1387 = vmul.f32 %v1344, %v1379
    %v1388 = vmul.f32 %v1346, %v1380
    %v1389 = vmul.f32 %v1348, %v1381
    %v1390 = vmul.f32 %v1350, %v1382
    %1391 = vrot.lane.b32.xlu0 %v304, 96
    %v1392 = vpop.permute.xlu0 %1391
    %v1395 = vsel %vm639, %v1383, 0
    %v1398 = vsel %vm639, %v1384, 0
    %v1401 = vsel %vm639, %v1385, 0
    %v1404 = vsel %vm639, %v1386, 0
    %v1407 = vsel %vm639, %v1387, 0
    %v1410 = vsel %vm639, %v1388, 0
    %v1413 = vsel %vm639, %v1389, 0
    %v1416 = vsel %vm639, %v1390, 0
    %1418 = vmatprep.subr.mxu0 0.0
    %1419 = vmatpush1.msra.mxu0 0.0
    %1420 = vmatprep.subr.mxu0 0.0
    %1421 = vmatpush1.msra.mxu0 0.0
    %1422 = vmatprep.subr.mxu0 0.0
    %1423 = vmatpush1.msra.mxu0 0.0
    %1424 = vmatprep.subr.mxu0 0.0
    %1425 = vmatpush1.msra.mxu0 0.0
    %1426 = vmatprep.subr.mxu0 0.0
    %1427 = vmatpush1.msra.mxu0 0.0
    %1428 = vmatprep.subr.mxu0 0.0
    %1429 = vmatpush1.msra.mxu0 0.0
    %1430 = vmatprep.subr.mxu0 0.0
    %1431 = vmatpush1.msra.mxu0 0.0
    %1432 = vmatprep.subr.mxu0 0.0
    %1433 = vmatpush1.msra.mxu0 0.0
    %1434 = vmatprep.subr.mxu0 0.0
    %1435 = vmatpush1.msra.mxu0 0.0
    %1436 = vmatprep.subr.mxu0 0.0
    %1437 = vmatpush1.msra.mxu0 0.0
    %1438 = vmatprep.subr.mxu0 0.0
    %1439 = vmatpush1.msra.mxu0 0.0
    %1440 = vmatprep.subr.mxu0 0.0
    %1441 = vmatpush1.msra.mxu0 0.0
    %1442 = vmatprep.subr.mxu0 0.0
    %1443 = vmatpush1.msra.mxu0 0.0
    %1444 = vmatprep.subr.mxu0 0.0
    %1445 = vmatpush1.msra.mxu0 0.0
    %1446 = vmatprep.subr.mxu0 0.0
    %1447 = vmatpush1.msra.mxu0 0.0
    %1448 = vmatprep.subr.mxu0 0.0
    %1449 = vmatpush1.msra.mxu0 %v1392
    %1450 = vmatprep.subr.mxu0 0.0
    %1451 = vmatpush2.msra.mxu0 0.0
    %1452 = vmatprep.subr.mxu0 0.0
    %1453 = vmatpush2.msra.mxu0 0.0
    %1454 = vmatprep.subr.mxu0 0.0
    %1455 = vmatpush2.msra.mxu0 0.0
    %1456 = vmatprep.subr.mxu0 0.0
    %1457 = vmatpush2.msra.mxu0 0.0
    %1458 = vmatprep.subr.mxu0 0.0
    %1459 = vmatpush2.msra.mxu0 0.0
    %1460 = vmatprep.subr.mxu0 0.0
    %1461 = vmatpush2.msra.mxu0 0.0
    %1462 = vmatprep.subr.mxu0 0.0
    %1463 = vmatpush2.msra.mxu0 0.0
    %1464 = vmatprep.subr.mxu0 0.0
    %1465 = vmatpush2.msra.mxu0 0.0
    %1466 = vmatprep.subr.mxu0 0.0
    %1467 = vmatpush2.msra.mxu0 0.0
    %1468 = vmatprep.subr.mxu0 0.0
    %1469 = vmatpush2.msra.mxu0 0.0
    %1470 = vmatprep.subr.mxu0 0.0
    %1471 = vmatpush2.msra.mxu0 0.0
    %1472 = vmatprep.subr.mxu0 0.0
    %1473 = vmatpush2.msra.mxu0 0.0
    %1474 = vmatprep.subr.mxu0 0.0
    %1475 = vmatpush2.msra.mxu0 0.0
    %1476 = vmatprep.subr.mxu0 0.0
    %1477 = vmatpush2.msra.mxu0 0.0
    %1478 = vmatprep.subr.mxu0 0.0
    %1479 = vmatpush2.msra.mxu0 0.0
    %1480 = vmatprep.subr.mxu0 0.0
    %1481 = vmatpush2.msra.mxu0 0.0
    %1482 = vmatprep.mubr.f32.mxu0 0.0
    %1483 = vmatmul.mubr.f32.gmra.mxu0 %v1395
    %v1484 = vpop.f32.mrf.mxu0
    %v1485 = vadd.f32 0.0, %v1484
    %v1486 = vpop.f32.mrf.mxu0
    %1487 = vmatprep.mubr.f32.mxu0 0.0
    %1488 = vmatmul.mubr.f32.gmra.mxu0 %v1398
    %v1489 = vpop.f32.mrf.mxu0
    %v1490 = vadd.f32 0.0, %v1489
    %v1491 = vpop.f32.mrf.mxu0
    %1492 = vmatprep.mubr.f32.mxu0 0.0
    %1493 = vmatmul.mubr.f32.gmra.mxu0 %v1401
    %v1494 = vpop.f32.mrf.mxu0
    %v1495 = vadd.f32 0.0, %v1494
    %v1496 = vpop.f32.mrf.mxu0
    %1497 = vmatprep.mubr.f32.mxu0 0.0
    %1498 = vmatmul.mubr.f32.gmra.mxu0 %v1404
    %v1499 = vpop.f32.mrf.mxu0
    %v1500 = vadd.f32 0.0, %v1499
    %v1501 = vpop.f32.mrf.mxu0
    %1502 = vmatprep.mubr.f32.mxu0 0.0
    %1503 = vmatmul.mubr.f32.gmra.mxu0 %v1407
    %v1504 = vpop.f32.mrf.mxu0
    %v1505 = vadd.f32 0.0, %v1504
    %v1506 = vpop.f32.mrf.mxu0
    %1507 = vmatprep.mubr.f32.mxu0 0.0
    %1508 = vmatmul.mubr.f32.gmra.mxu0 %v1410
    %v1509 = vpop.f32.mrf.mxu0
    %v1510 = vadd.f32 0.0, %v1509
    %v1511 = vpop.f32.mrf.mxu0
    %1512 = vmatprep.mubr.f32.mxu0 0.0
    %1513 = vmatmul.mubr.f32.gmra.mxu0 %v1413
    %v1514 = vpop.f32.mrf.mxu0
    %v1515 = vadd.f32 0.0, %v1514
    %v1516 = vpop.f32.mrf.mxu0
    %1517 = vmatprep.mubr.f32.mxu0 0.0
    %1518 = vmatmul.mubr.f32.gmra.mxu0 %v1416
    %v1519 = vpop.f32.mrf.mxu0
    %v1520 = vadd.f32 0.0, %v1519
    %v1521 = vpop.f32.mrf.mxu0
    %1522 = vdwg.mxu0
    %v1523 = vmul.f32 %v1485, %v307
    %v1524 = vmul.f32 %v1490, %v308
    %v1525 = vmul.f32 %v1495, %v309
    %v1526 = vmul.f32 %v1500, %v310
    %v1527 = vmul.f32 %v1505, %v311
    %v1528 = vmul.f32 %v1510, %v312
    %v1529 = vmul.f32 %v1515, %v313
    %v1530 = vmul.f32 %v1520, %v314
    %1531 = vrot.lane.b32.xlu0 %v207, 96
    %v1532 = vpop.permute.xlu0 %1531
    %1533 = vrot.lane.b32.xlu0 %v212, 96
    %v1534 = vpop.permute.xlu0 %1533
    %v1538 = vsel %vm590, %v1299, 0
    %v1541 = vsel %vm590, %v1300, 0
    %v1544 = vsel %vm590, %v1301, 0
    %v1547 = vsel %vm590, %v1302, 0
    %1549 = vmatprep.subr.mxu0 0.0
    %1550 = vmatpush1.msra.mxu0 0.0
    %1551 = vmatprep.subr.mxu0 0.0
    %1552 = vmatpush1.msra.mxu0 0.0
    %1553 = vmatprep.subr.mxu0 0.0
    %1554 = vmatpush1.msra.mxu0 0.0
    %1555 = vmatprep.subr.mxu0 0.0
    %1556 = vmatpush1.msra.mxu0 0.0
    %1557 = vmatprep.subr.mxu0 0.0
    %1558 = vmatpush1.msra.mxu0 0.0
    %1559 = vmatprep.subr.mxu0 0.0
    %1560 = vmatpush1.msra.mxu0 0.0
    %1561 = vmatprep.subr.mxu0 0.0
    %1562 = vmatpush1.msra.mxu0 0.0
    %1563 = vmatprep.subr.mxu0 0.0
    %1564 = vmatpush1.msra.mxu0 0.0
    %1565 = vmatprep.subr.mxu0 0.0
    %1566 = vmatpush1.msra.mxu0 0.0
    %1567 = vmatprep.subr.mxu0 0.0
    %1568 = vmatpush1.msra.mxu0 0.0
    %1569 = vmatprep.subr.mxu0 0.0
    %1570 = vmatpush1.msra.mxu0 0.0
    %1571 = vmatprep.subr.mxu0 0.0
    %1572 = vmatpush1.msra.mxu0 0.0
    %1573 = vmatprep.subr.mxu0 0.0
    %1574 = vmatpush1.msra.mxu0 0.0
    %1575 = vmatprep.subr.mxu0 0.0
    %1576 = vmatpush1.msra.mxu0 0.0
    %1577 = vmatprep.subr.mxu0 0.0
    %1578 = vmatpush1.msra.mxu0 %v1534
    %1579 = vmatprep.subr.mxu0 0.0
    %1580 = vmatpush1.msra.mxu0 %v1532
    %1581 = vmatprep.subr.mxu0 0.0
    %1582 = vmatpush2.msra.mxu0 0.0
    %1583 = vmatprep.subr.mxu0 0.0
    %1584 = vmatpush2.msra.mxu0 0.0
    %1585 = vmatprep.subr.mxu0 0.0
    %1586 = vmatpush2.msra.mxu0 0.0
    %1587 = vmatprep.subr.mxu0 0.0
    %1588 = vmatpush2.msra.mxu0 0.0
    %1589 = vmatprep.subr.mxu0 0.0
    %1590 = vmatpush2.msra.mxu0 0.0
    %1591 = vmatprep.subr.mxu0 0.0
    %1592 = vmatpush2.msra.mxu0 0.0
    %1593 = vmatprep.subr.mxu0 0.0
    %1594 = vmatpush2.msra.mxu0 0.0
    %1595 = vmatprep.subr.mxu0 0.0
    %1596 = vmatpush2.msra.mxu0 0.0
    %1597 = vmatprep.subr.mxu0 0.0
    %1598 = vmatpush2.msra.mxu0 0.0
    %1599 = vmatprep.subr.mxu0 0.0
    %1600 = vmatpush2.msra.mxu0 0.0
    %1601 = vmatprep.subr.mxu0 0.0
    %1602 = vmatpush2.msra.mxu0 0.0
    %1603 = vmatprep.subr.mxu0 0.0
    %1604 = vmatpush2.msra.mxu0 0.0
    %1605 = vmatprep.subr.mxu0 0.0
    %1606 = vmatpush2.msra.mxu0 0.0
    %1607 = vmatprep.subr.mxu0 0.0
    %1608 = vmatpush2.msra.mxu0 0.0
    %1609 = vmatprep.subr.mxu0 0.0
    %1610 = vmatpush2.msra.mxu0 0.0
    %1611 = vmatprep.subr.mxu0 0.0
    %1612 = vmatpush2.msra.mxu0 0.0
    %1613 = vmatprep.mubr.f32.mxu0 0.0
    %1614 = vmatmul.mubr.f32.gmra.mxu0 %v1538
    %v1615 = vpop.f32.mrf.mxu0
    %v1616 = vadd.f32 0.0, %v1615
    %v1617 = vpop.f32.mrf.mxu0
    %1618 = vmatprep.mubr.f32.mxu0 0.0
    %1619 = vmatmul.mubr.f32.gmra.mxu0 %v1541
    %v1620 = vpop.f32.mrf.mxu0
    %v1621 = vadd.f32 0.0, %v1620
    %v1622 = vpop.f32.mrf.mxu0
    %1623 = vmatprep.mubr.f32.mxu0 0.0
    %1624 = vmatmul.mubr.f32.gmra.mxu0 %v1544
    %v1625 = vpop.f32.mrf.mxu0
    %v1626 = vadd.f32 0.0, %v1625
    %v1627 = vpop.f32.mrf.mxu0
    %1628 = vmatprep.mubr.f32.mxu0 0.0
    %1629 = vmatmul.mubr.f32.gmra.mxu0 %v1547
    %v1630 = vpop.f32.mrf.mxu0
    %v1631 = vadd.f32 0.0, %v1630
    %v1632 = vpop.f32.mrf.mxu0
    %1633 = vdwg.mxu0
    %v1634 = vmul.f32 %v1616, %v315
    %v1635 = vmul.f32 %v1621, %v316
    %v1636 = vmul.f32 %v1626, %v317
    %v1637 = vmul.f32 %v1631, %v318
    %v1638 = vadd.f32 %v1523, %v1525
    %v1639 = vadd.f32 %v1524, %v1526
    %v1640 = vadd.f32 %v1634, %v1635
    %v1641 = vadd.f32 %v1638, %v1527
    %v1642 = vadd.f32 %v1639, %v1528
    %v1643 = vadd.f32 %v1640, %v1636
    %v1644 = vadd.f32 %v1641, %v1529
    %v1645 = vadd.f32 %v1642, %v1530
    %v1646 = vadd.f32 %v1643, %v1637
    %v1647 = vld [vmem:[#allocation5] sm:$0xff]
    %v1648 = vld [vmem:[#allocation5 + $0x8] sm:$0xff]
    %v1649 = vld [vmem:[#allocation5 + $0x10] sm:$0xff]
    %v1650 = vld [vmem:[#allocation5 + $0x18] sm:$0xff]
    %v1651 = vld [vmem:[%s7] sm:$0x1]
    %v1653 = vlaneseq
    %v1654 = vshrl.u32 %v1653, 7
    %v1655 = vsub.s32 0, %v1654
    %v1656 = vrot.slane %v1651, %v1655
    %v1659 = vsel %vm117, %v981, 0
    %v1662 = vsel %vm117, %v982, 0
    %v1665 = vsel %vm117, %v1644, 0
    %v1668 = vsel %vm117, %v1645, 0
    %1670 = vmatprep.subr.mxu0 0.0
    %1671 = vmatpush1.msra.mxu0 0.0
    %1672 = vmatprep.subr.mxu0 0.0
    %1673 = vmatpush1.msra.mxu0 0.0
    %1674 = vmatprep.subr.mxu0 0.0
    %1675 = vmatpush1.msra.mxu0 0.0
    %1676 = vmatprep.subr.mxu0 0.0
    %1677 = vmatpush1.msra.mxu0 0.0
    %1678 = vmatprep.subr.mxu0 0.0
    %1679 = vmatpush1.msra.mxu0 0.0
    %1680 = vmatprep.subr.mxu0 0.0
    %1681 = vmatpush1.msra.mxu0 0.0
    %1682 = vmatprep.subr.mxu0 0.0
    %1683 = vmatpush1.msra.mxu0 0.0
    %1684 = vmatprep.subr.mxu0 0.0
    %1685 = vmatpush1.msra.mxu0 0.0
    %1686 = vmatprep.subr.mxu0 0.0
    %1687 = vmatpush1.msra.mxu0 0.0
    %1688 = vmatprep.subr.mxu0 0.0
    %1689 = vmatpush1.msra.mxu0 0.0
    %1690 = vmatprep.subr.mxu0 0.0
    %1691 = vmatpush1.msra.mxu0 0.0
    %1692 = vmatprep.subr.mxu0 0.0
    %1693 = vmatpush1.msra.mxu0 0.0
    %1694 = vmatprep.subr.mxu0 0.0
    %1695 = vmatpush1.msra.mxu0 %v1650
    %1696 = vmatprep.subr.mxu0 0.0
    %1697 = vmatpush1.msra.mxu0 %v1649
    %1698 = vmatprep.subr.mxu0 0.0
    %1699 = vmatpush1.msra.mxu0 %v1648
    %1700 = vmatprep.subr.mxu0 0.0
    %1701 = vmatpush1.msra.mxu0 %v1647
    %1702 = vmatprep.subr.mxu0 0.0
    %1703 = vmatpush2.msra.mxu0 0.0
    %1704 = vmatprep.subr.mxu0 0.0
    %1705 = vmatpush2.msra.mxu0 0.0
    %1706 = vmatprep.subr.mxu0 0.0
    %1707 = vmatpush2.msra.mxu0 0.0
    %1708 = vmatprep.subr.mxu0 0.0
    %1709 = vmatpush2.msra.mxu0 0.0
    %1710 = vmatprep.subr.mxu0 0.0
    %1711 = vmatpush2.msra.mxu0 0.0
    %1712 = vmatprep.subr.mxu0 0.0
    %1713 = vmatpush2.msra.mxu0 0.0
    %1714 = vmatprep.subr.mxu0 0.0
    %1715 = vmatpush2.msra.mxu0 0.0
    %1716 = vmatprep.subr.mxu0 0.0
    %1717 = vmatpush2.msra.mxu0 0.0
    %1718 = vmatprep.subr.mxu0 0.0
    %1719 = vmatpush2.msra.mxu0 0.0
    %1720 = vmatprep.subr.mxu0 0.0
    %1721 = vmatpush2.msra.mxu0 0.0
    %1722 = vmatprep.subr.mxu0 0.0
    %1723 = vmatpush2.msra.mxu0 0.0
    %1724 = vmatprep.subr.mxu0 0.0
    %1725 = vmatpush2.msra.mxu0 0.0
    %1726 = vmatprep.subr.mxu0 0.0
    %1727 = vmatpush2.msra.mxu0 0.0
    %1728 = vmatprep.subr.mxu0 0.0
    %1729 = vmatpush2.msra.mxu0 0.0
    %1730 = vmatprep.subr.mxu0 0.0
    %1731 = vmatpush2.msra.mxu0 0.0
    %1732 = vmatprep.subr.mxu0 0.0
    %1733 = vmatpush2.msra.mxu0 0.0
    %1734 = vmatprep.mubr.f32.mxu0 0.0
    %1735 = vmatmul.mubr.f32.gmra.mxu0 %v1659
    %v1736 = vpop.f32.mrf.mxu0
    %v1737 = vadd.f32 %v1656, %v1736
    %v1738 = vpop.f32.mrf.mxu0
    %1739 = vmatprep.mubr.f32.mxu0 0.0
    %1740 = vmatmul.mubr.f32.gmra.mxu0 %v1662
    %v1741 = vpop.f32.mrf.mxu0
    %v1742 = vadd.f32 %v1656, %v1741
    %v1743 = vpop.f32.mrf.mxu0
    %1744 = vmatprep.mubr.f32.mxu0 0.0
    %1745 = vmatmul.mubr.f32.gmra.mxu0 %v1665
    %v1746 = vpop.f32.mrf.mxu0
    %v1747 = vadd.f32 %v1656, %v1746
    %v1748 = vpop.f32.mrf.mxu0
    %1749 = vmatprep.mubr.f32.mxu0 0.0
    %1750 = vmatmul.mubr.f32.gmra.mxu0 %v1668
    %v1751 = vpop.f32.mrf.mxu0
    %v1752 = vadd.f32 %v1656, %v1751
    %v1753 = vpop.f32.mrf.mxu0
    %1754 = vdwg.mxu0
    %v1755 = vld [vmem:[#allocation7] sm:$0xff]
    %v1756 = vld [vmem:[#allocation7 + $0x8] sm:$0xff]
    %v1757 = vld [vmem:[#allocation7 + $0x10] sm:$0xff]
    %v1758 = vld [vmem:[#allocation7 + $0x18] sm:$0xff]
    %v1759 = vld [vmem:[%s9] sm:$0x1]
    %v1761 = vlaneseq
    %v1762 = vshrl.u32 %v1761, 7
    %v1763 = vsub.s32 0, %v1762
    %v1764 = vrot.slane %v1759, %v1763
    %v1767 = vsel %vm117, %v983, 0
    %v1770 = vsel %vm117, %v1646, 0
    %1772 = vmatprep.subr.mxu0 0.0
    %1773 = vmatpush1.msra.mxu0 0.0
    %1774 = vmatprep.subr.mxu0 0.0
    %1775 = vmatpush1.msra.mxu0 0.0
    %1776 = vmatprep.subr.mxu0 0.0
    %1777 = vmatpush1.msra.mxu0 0.0
    %1778 = vmatprep.subr.mxu0 0.0
    %1779 = vmatpush1.msra.mxu0 0.0
    %1780 = vmatprep.subr.mxu0 0.0
    %1781 = vmatpush1.msra.mxu0 0.0
    %1782 = vmatprep.subr.mxu0 0.0
    %1783 = vmatpush1.msra.mxu0 0.0
    %1784 = vmatprep.subr.mxu0 0.0
    %1785 = vmatpush1.msra.mxu0 0.0
    %1786 = vmatprep.subr.mxu0 0.0
    %1787 = vmatpush1.msra.mxu0 0.0
    %1788 = vmatprep.subr.mxu0 0.0
    %1789 = vmatpush1.msra.mxu0 0.0
    %1790 = vmatprep.subr.mxu0 0.0
    %1791 = vmatpush1.msra.mxu0 0.0
    %1792 = vmatprep.subr.mxu0 0.0
    %1793 = vmatpush1.msra.mxu0 0.0
    %1794 = vmatprep.subr.mxu0 0.0
    %1795 = vmatpush1.msra.mxu0 0.0
    %1796 = vmatprep.subr.mxu0 0.0
    %1797 = vmatpush1.msra.mxu0 %v1758
    %1798 = vmatprep.subr.mxu0 0.0
    %1799 = vmatpush1.msra.mxu0 %v1757
    %1800 = vmatprep.subr.mxu0 0.0
    %1801 = vmatpush1.msra.mxu0 %v1756
    %1802 = vmatprep.subr.mxu0 0.0
    %1803 = vmatpush1.msra.mxu0 %v1755
    %1804 = vmatprep.subr.mxu0 0.0
    %1805 = vmatpush2.msra.mxu0 0.0
    %1806 = vmatprep.subr.mxu0 0.0
    %1807 = vmatpush2.msra.mxu0 0.0
    %1808 = vmatprep.subr.mxu0 0.0
    %1809 = vmatpush2.msra.mxu0 0.0
    %1810 = vmatprep.subr.mxu0 0.0
    %1811 = vmatpush2.msra.mxu0 0.0
    %1812 = vmatprep.subr.mxu0 0.0
    %1813 = vmatpush2.msra.mxu0 0.0
    %1814 = vmatprep.subr.mxu0 0.0
    %1815 = vmatpush2.msra.mxu0 0.0
    %1816 = vmatprep.subr.mxu0 0.0
    %1817 = vmatpush2.msra.mxu0 0.0
    %1818 = vmatprep.subr.mxu0 0.0
    %1819 = vmatpush2.msra.mxu0 0.0
    %1820 = vmatprep.subr.mxu0 0.0
    %1821 = vmatpush2.msra.mxu0 0.0
    %1822 = vmatprep.subr.mxu0 0.0
    %1823 = vmatpush2.msra.mxu0 0.0
    %1824 = vmatprep.subr.mxu0 0.0
    %1825 = vmatpush2.msra.mxu0 0.0
    %1826 = vmatprep.subr.mxu0 0.0
    %1827 = vmatpush2.msra.mxu0 0.0
    %1828 = vmatprep.subr.mxu0 0.0
    %1829 = vmatpush2.msra.mxu0 0.0
    %1830 = vmatprep.subr.mxu0 0.0
    %1831 = vmatpush2.msra.mxu0 0.0
    %1832 = vmatprep.subr.mxu0 0.0
    %1833 = vmatpush2.msra.mxu0 0.0
    %1834 = vmatprep.subr.mxu0 0.0
    %1835 = vmatpush2.msra.mxu0 0.0
    %1836 = vmatprep.mubr.f32.mxu0 0.0
    %1837 = vmatmul.mubr.f32.gmra.mxu0 %v1767
    %v1838 = vpop.f32.mrf.mxu0
    %v1839 = vadd.f32 %v1764, %v1838
    %v1840 = vpop.f32.mrf.mxu0
    %1841 = vmatprep.mubr.f32.mxu0 0.0
    %1842 = vmatmul.mubr.f32.gmra.mxu0 %v1770
    %v1843 = vpop.f32.mrf.mxu0
    %v1844 = vadd.f32 %v1764, %v1843
    %v1845 = vpop.f32.mrf.mxu0
    %1846 = vdwg.mxu0
    %1847 = vst.msk [vmem:[#allocation10] sm:$0xff] %vm117, %v1737
    %1848 = vst.msk [vmem:[#allocation10 + $0x8] sm:$0xff] %vm117, %v1742
    %1849 = vst.msk [vmem:[#allocation10 + $0x10] sm:$0xff] %vm117, %v1747
    %1850 = vst.msk [vmem:[#allocation10 + $0x18] sm:$0xff] %vm117, %v1752
    %1851 = vst.msk [vmem:[#allocation11] sm:$0xff] %vm117, %v1839
    %1852 = vst.msk [vmem:[#allocation11 + $0x8] sm:$0xff] %vm117, %v1844
    // Predicated region
    $region66: #{tpu_custom_call.1} parent=1 // pred_check
      _
    $region67: #{tpu_custom_call.1} parent=1 // pred_check_branch
      %1854 = sbr.rel (0) target = $region69
    $region68: #{tpu_custom_call.1} parent=1 // pred_region
      %s1856 = ssub.s32 512, 512
      %1857 = vsyncadd [#allocation4], %s1856
      %s1858 = sshll.u32 [#allocation10], 4
      %s1859 = int_to_ptr.vmem [resolvable:$true] %s1858
      %1864 = dma.vmem_to_hbm [thread:$0]  %s1859, 512, %s12, [#allocation4], 128, 128, 8
    $region69: #{tpu_custom_call.1} parent=1 // pred_fallthru
      _
    // Predicated region
    $region70: #{tpu_custom_call.1} parent=1 // pred_check
      _
    $region71: #{tpu_custom_call.1} parent=1 // pred_check_branch
      %1866 = sbr.rel (0) target = $region73
    $region72: #{tpu_custom_call.1} parent=1 // pred_region
      %s1868 = ssub.s32 256, 256
      %1869 = vsyncadd [#allocation12], %s1868
      %s1870 = sshll.u32 [#allocation11], 4
      %s1871 = int_to_ptr.vmem [resolvable:$true] %s1870
      %1876 = dma.vmem_to_hbm [thread:$0]  %s1871, 256, %s13, [#allocation12], 128, 128, 8
    $region73: #{tpu_custom_call.1} parent=1 // pred_fallthru
      _
    // Predicated region
    $region74: #{tpu_custom_call.1} parent=1 // pred_check
      _
    $region75: #{tpu_custom_call.1} parent=1 // pred_check_branch
      %1878 = sbr.rel (0) target = $region77
    $region76: #{tpu_custom_call.1} parent=1 // pred_region
      %1879 = dma.done [#allocation4], 512
    $region77: #{tpu_custom_call.1} parent=1 // pred_fallthru
      _
    // Predicated region
    $region78: #{tpu_custom_call.1} parent=1 // pred_check
      _
    $region79: #{tpu_custom_call.1} parent=1 // pred_check_branch
      %1881 = sbr.rel (0) target = $region81
    $region80: #{tpu_custom_call.1} parent=1 // pred_region
      %1882 = dma.done [#allocation12], 256
    $region81: #{tpu_custom_call.1} parent=1 // pred_fallthru
      _
    %1883 = vsyncpa [#allocation3], 1
    %1884 = vsyncpa [#allocation6], 1
    %1885 = vsyncpa [#allocation9], 1
    %1886 = vsyncpa [#allocation4], 1
    %1887 = vsyncpa [#allocation12], 1

</llo_original>
